<compile_context>
chip_gen: v7x
topology: tpu7x:2x2x1
jax: 0.10.0
libtpu: 0.0.40
codegen_flags: <defaults>
</compile_context>

<pallas_src>
import jax
import jax.numpy as jnp
from jax.experimental import pallas as pl
from jax.experimental.pallas import tpu as pltpu


def _rnn_forward_kernel(x_ref, demo_ref, we_x_ref, we_d_ref,
                        w_ih_ref, w_hh_ref, b_gi_ref, b_hn_ref,
                        w_out_ref, b_out_ref,
                        emb_ref, states_ref, final_ref):
    """Whole forward pass in one invocation (everything VMEM-resident)."""
    batch = demo_ref.shape[0]
    seq_len = x_ref.shape[0] // batch
    embed = we_x_ref.shape[-1]
    hidden = w_hh_ref.shape[-1]
    out_dim = w_out_ref.shape[-1]

    # ---- Hoisted input-to-hidden path: wide matmuls over M = seq*batch rows ----
    # embed(cat(x_t, demo)) for all t: concat fused away into two matmuls; the
    # time-invariant demo projection is broadcast along the (leading) time axis.
    demo_proj = jnp.dot(demo_ref[...], we_d_ref[...],
                        preferred_element_type=jnp.float32)               # [B, E]
    emb = jnp.dot(x_ref[...], we_x_ref[...],
                  preferred_element_type=jnp.float32)                     # [S*B, E]
    emb = (emb.reshape(seq_len, batch, embed) + demo_proj[None, :, :]
           ).reshape(seq_len * batch, embed)                              # time-major
    emb_bf = emb.astype(jnp.bfloat16)

    # All-timestep gate pre-activations (PyTorch gate order r, z, n).  b_gi already
    # contains b_ih (+ b_hh for r and z) -- nothing bias-related left per step except
    # b_hh_n, which must stay inside the r-multiplied term.
    gi_r = jnp.dot(emb_bf, w_ih_ref[0], preferred_element_type=jnp.float32) + b_gi_ref[0]
    gi_z = jnp.dot(emb_bf, w_ih_ref[1], preferred_element_type=jnp.float32) + b_gi_ref[1]
    gi_n = jnp.dot(emb_bf, w_ih_ref[2], preferred_element_type=jnp.float32) + b_gi_ref[2]

    w_hh_r = w_hh_ref[0]
    w_hh_z = w_hh_ref[1]
    w_hh_n = w_hh_ref[2]
    b_hn = b_hn_ref[...]

    # ---- Serial recurrence: only h @ W_hh remains inside the loop ----
    # Fully unrolled at trace time (seq_len is static and small), so all slice
    # indices below are static.
    h = jnp.zeros((batch, hidden), jnp.float32)
    for t in range(seq_len):
        lo = t * batch
        h_bf = h.astype(jnp.bfloat16)
        gh_r = jnp.dot(h_bf, w_hh_r, preferred_element_type=jnp.float32)
        gh_z = jnp.dot(h_bf, w_hh_z, preferred_element_type=jnp.float32)
        gh_n = jnp.dot(h_bf, w_hh_n, preferred_element_type=jnp.float32)

        r = jax.nn.sigmoid(gi_r[lo:lo + batch] + gh_r)
        z = jax.nn.sigmoid(gi_z[lo:lo + batch] + gh_z)
        n = jnp.tanh(gi_n[lo:lo + batch] + r * (gh_n + b_hn))
        h = (1.0 - z) * n + z * h

        # Lane-dense batch-major output slabs, filled with static lane slices and
        # written back to HBM once after the kernel (no per-step DMA).
        states_ref[:, t * hidden:(t + 1) * hidden] = h
        emb_ref[:, t * embed:(t + 1) * embed] = emb[lo:lo + batch]

    # ---- Final linear + softmax (runs once) ----
    liny = jnp.dot(h.astype(jnp.bfloat16), w_out_ref[...],
                   preferred_element_type=jnp.float32) + b_out_ref[...]   # [B, O]
    m = jnp.max(liny, axis=-1, keepdims=True)
    e = jnp.exp(liny - m)
    soft = e * pl.reciprocal(jnp.sum(e, axis=-1, keepdims=True), approx=True)
    final_ref[:, 0:out_dim] = soft          # merged [softmax | linear_y] buffer
    final_ref[:, out_dim:2 * out_dim] = liny


def rnn_forward(inputs, inputs_demoips, kparams, *, ct=True):
    """Pure-JAX wrapper (aggregation / layout glue) + one pallas_call."""
    we_x, we_d, w_ih, w_hh, b_gi, b_hn, w_out, b_out = kparams

    # embedding_layer() input aggregation (ct=False path is plain-JAX glue).
    if ct:
        x_agg = inputs                                   # [batch, seq, feat_main]
    else:
        x_agg = jnp.sum(inputs, axis=2)                  # sum over dim=2
        if x_agg.ndim > 2 and x_agg.shape[2] == 1:       # torch.squeeze(dim=2)
            x_agg = jnp.squeeze(x_agg, axis=2)

    batch, seq_len, feat_main = x_agg.shape
    embed_size = we_x.shape[-1]
    hidden_size = w_hh.shape[-1]
    out_dim = w_out.shape[-1]

    # Time-major flatten so each timestep's rows form one aligned sublane tile
    # inside the kernel; cast MXU operands to bf16 (f32 accumulation in-kernel).
    x_flat = jnp.transpose(x_agg, (1, 0, 2)).reshape(seq_len * batch, feat_main)
    x_flat = x_flat.astype(jnp.bfloat16)
    demo = inputs_demoips.astype(jnp.bfloat16)

    vmem = pl.BlockSpec(memory_space=pltpu.MemorySpace.VMEM)

    emb_slab, states_slab, final = pl.pallas_call(
        _rnn_forward_kernel,
        out_shape=(
            jax.ShapeDtypeStruct((batch, seq_len * embed_size), jnp.float32),
            jax.ShapeDtypeStruct((batch, seq_len * hidden_size), jnp.float32),
            jax.ShapeDtypeStruct((batch, 2 * out_dim), jnp.float32),
        ),
        in_specs=[vmem] * 10,
        out_specs=(vmem, vmem, vmem),
    )(x_flat, demo, we_x, we_d, w_ih, w_hh, b_gi, b_hn, w_out, b_out)

    embedding = emb_slab.reshape(batch, seq_len, embed_size)     # free (contiguous)
    states_rnn = states_slab.reshape(batch, seq_len, hidden_size)
    out = final[:, :out_dim]                                     # softmax(linear_y)
    linear_y = final[:, out_dim:]
    return out, [states_rnn, embedding, linear_y]


rnn_forward = jax.jit(rnn_forward, static_argnames=("ct",))


def init_params(key, feat_main, feat_demo, embed_size, hidden_size,
                output_size, initrange):
    """uniform(-initrange, initrange) for every parameter (mirrors init_weights).

    Weights are stored pre-transposed as [in, out]; the embed weight is split into
    the inputs part and the demoips part (fuses the concat); GRU weights/biases are
    stacked per gate on a leading axis (order r, z, n).
    """
    ks = jax.random.split(key, 8)
    u = lambda k, shape: jax.random.uniform(
        k, shape, dtype=jnp.float32, minval=-initrange, maxval=initrange)

    we_x = u(ks[0], (feat_main, embed_size))             # embed (no bias), inputs part
    we_d = u(ks[1], (feat_demo, embed_size))             # embed, demoips part
    w_ih = u(ks[2], (3, embed_size, hidden_size))        # GRU gates (r, z, n)
    w_hh = u(ks[3], (3, hidden_size, hidden_size))
    b_ih = u(ks[4], (3, 1, hidden_size))
    b_hh = u(ks[5], (3, 1, hidden_size))
    w_out = u(ks[6], (hidden_size, output_size))         # final Linear
    b_out = u(ks[7], (1, output_size))
    return (we_x, we_d, w_ih, w_hh, b_ih, b_hh, w_out, b_out)


def prepare_kernel_params(params):
    """One-time preprocessing: bf16 weights + folded biases for the kernel.

    b_gi[r] = b_ih_r + b_hh_r, b_gi[z] = b_ih_z + b_hh_z, b_gi[n] = b_ih_n only;
    b_hh_n must stay separate (it sits inside the r-multiplied term of the n gate).
    """
    we_x, we_d, w_ih, w_hh, b_ih, b_hh, w_out, b_out = params
    bf = lambda a: a.astype(jnp.bfloat16)
    b_gi = jnp.stack([b_ih[0] + b_hh[0], b_ih[1] + b_hh[1], b_ih[2]], axis=0)
    b_hn = b_hh[2]
    return (bf(we_x), bf(we_d), bf(w_ih), bf(w_hh), b_gi, b_hn, bf(w_out), b_out)


def _reference_forward(inputs, demo, params):
    """Plain-JAX f32 reference (GRU, batch_first, h0 = 0)."""
    we_x, we_d, w_ih, w_hh, b_ih, b_hh, w_out, b_out = params
    batch, seq_len, _ = inputs.shape
    hidden = w_hh.shape[-1]

    embs = jnp.einsum('bsf,fe->bse', inputs, we_x) + (demo @ we_d)[:, None, :]
    h = jnp.zeros((batch, hidden), jnp.float32)
    states = []
    for t in range(seq_len):
        x = embs[:, t]
        r = jax.nn.sigmoid(x @ w_ih[0] + b_ih[0] + h @ w_hh[0] + b_hh[0])
        z = jax.nn.sigmoid(x @ w_ih[1] + b_ih[1] + h @ w_hh[1] + b_hh[1])
        n = jnp.tanh(x @ w_ih[2] + b_ih[2] + r * (h @ w_hh[2] + b_hh[2]))
        h = (1.0 - z) * n + z * h
        states.append(h)
    states = jnp.stack(states, axis=1)
    liny = h @ w_out + b_out
    out = jax.nn.softmax(liny, axis=-1)
    return out, states, embs, liny


if __name__ == "__main__":
    key = jax.random.PRNGKey(0)

    # Small shapes consistent with the module's forward.
    batch = 8
    seq_len = 8
    feat_main, feat_demo = 20, 12       # input_size = 32 after the (fused) concat
    embed_size = 32
    hidden_size = 32
    output_size = 4
    initrange = 0.1

    k_in, k_demo, k_par = jax.random.split(key, 3)
    inputs = jax.random.normal(k_in, (batch, seq_len, feat_main), dtype=jnp.float32)
    inputs_demoips = jax.random.normal(k_demo, (batch, feat_demo), dtype=jnp.float32)

    params = init_params(k_par, feat_main, feat_demo, embed_size, hidden_size,
                         output_size, initrange)
    kparams = prepare_kernel_params(params)      # bf16 weights + folded biases (once)

    out, (states_rnn, embedding, linear_y) = rnn_forward(
        inputs, inputs_demoips, kparams, ct=True)
    jax.block_until_ready((out, states_rnn, embedding, linear_y))

    # Sanity check vs. plain-JAX f32 reference.  Tolerance is relaxed because the
    # kernel uses bf16 MXU operands (f32 accumulation) and an approx reciprocal in
    # the final softmax.
    out_r, states_r, emb_r, liny_r = _reference_forward(inputs, inputs_demoips, params)
    atol = rtol = 3e-2
    assert jnp.allclose(embedding, emb_r, atol=atol, rtol=rtol)
    assert jnp.allclose(states_rnn, states_r, atol=atol, rtol=rtol)
    assert jnp.allclose(linear_y, liny_r, atol=atol, rtol=rtol)
    assert jnp.allclose(out, out_r, atol=atol, rtol=rtol)

    print("KERNEL_OK")
</pallas_src>

<mosaic_0001>
module attributes {stable_mosaic.version = 11 : i64} {
  func.func @_rnn_forward_kernel(%arg0: memref<64x20xbf16, #tpu.memory_space<vmem>>, %arg1: memref<8x12xbf16, #tpu.memory_space<vmem>>, %arg2: memref<20x32xbf16, #tpu.memory_space<vmem>>, %arg3: memref<12x32xbf16, #tpu.memory_space<vmem>>, %arg4: memref<3x32x32xbf16, #tpu.memory_space<vmem>>, %arg5: memref<3x32x32xbf16, #tpu.memory_space<vmem>>, %arg6: memref<3x1x32xf32, #tpu.memory_space<vmem>>, %arg7: memref<1x32xf32, #tpu.memory_space<vmem>>, %arg8: memref<32x4xbf16, #tpu.memory_space<vmem>>, %arg9: memref<1x4xf32, #tpu.memory_space<vmem>>, %arg10: memref<8x256xf32, #tpu.memory_space<vmem>>, %arg11: memref<8x256xf32, #tpu.memory_space<vmem>>, %arg12: memref<8x8xf32, #tpu.memory_space<vmem>>) attributes {dimension_semantics = [], scalar_prefetch = 0 : i64, scratch_operands = 0 : i64, tpu.core_type = #tpu.core_type<tc>} {
    %c0 = arith.constant 0 : index
    %c0_0 = arith.constant 0 : index
    %0 = vector.load %arg1[%c0, %c0_0] : memref<8x12xbf16, #tpu.memory_space<vmem>>, vector<8x12xbf16>
    %c0_1 = arith.constant 0 : index
    %c0_2 = arith.constant 0 : index
    %1 = vector.load %arg3[%c0_1, %c0_2] : memref<12x32xbf16, #tpu.memory_space<vmem>>, vector<12x32xbf16>
    %cst = arith.constant dense<0.000000e+00> : vector<8x32xf32>
    %2 = tpu.matmul %0, %1, %cst {dimension_numbers = #tpu.dot_dimension_numbers<[1], [0], [0], [1], [0, 0, 1, 1], [], []>} : vector<8x12xbf16>, vector<12x32xbf16>, vector<8x32xf32> -> vector<8x32xf32>
    %c0_3 = arith.constant 0 : index
    %c0_4 = arith.constant 0 : index
    %3 = vector.load %arg0[%c0_3, %c0_4] : memref<64x20xbf16, #tpu.memory_space<vmem>>, vector<64x20xbf16>
    %c0_5 = arith.constant 0 : index
    %c0_6 = arith.constant 0 : index
    %4 = vector.load %arg2[%c0_5, %c0_6] : memref<20x32xbf16, #tpu.memory_space<vmem>>, vector<20x32xbf16>
    %cst_7 = arith.constant dense<0.000000e+00> : vector<64x32xf32>
    %5 = tpu.matmul %3, %4, %cst_7 {dimension_numbers = #tpu.dot_dimension_numbers<[1], [0], [0], [1], [0, 0, 1, 1], [], []>} : vector<64x20xbf16>, vector<20x32xbf16>, vector<64x32xf32> -> vector<64x32xf32>
    %6 = vector.shape_cast %5 : vector<64x32xf32> to vector<8x8x32xf32>
    %7 = vector.shape_cast %2 : vector<8x32xf32> to vector<1x8x32xf32>
    %8 = vector.broadcast %7 : vector<1x8x32xf32> to vector<8x8x32xf32>
    %9 = arith.addf %6, %8 : vector<8x8x32xf32>
    %10 = vector.shape_cast %9 : vector<8x8x32xf32> to vector<64x32xf32>
    %11 = arith.truncf %10 : vector<64x32xf32> to vector<64x32xbf16>
    %c0_8 = arith.constant 0 : index
    %c0_9 = arith.constant 0 : index
    %c0_10 = arith.constant 0 : index
    %12 = vector.load %arg4[%c0_8, %c0_9, %c0_10] : memref<3x32x32xbf16, #tpu.memory_space<vmem>>, vector<1x32x32xbf16>
    %13 = vector.shape_cast %12 : vector<1x32x32xbf16> to vector<32x32xbf16>
    %cst_11 = arith.constant dense<0.000000e+00> : vector<64x32xf32>
    %14 = tpu.matmul %11, %13, %cst_11 {dimension_numbers = #tpu.dot_dimension_numbers<[1], [0], [0], [1], [0, 0, 1, 1], [], []>} : vector<64x32xbf16>, vector<32x32xbf16>, vector<64x32xf32> -> vector<64x32xf32>
    %c0_12 = arith.constant 0 : index
    %c0_13 = arith.constant 0 : index
    %c0_14 = arith.constant 0 : index
    %15 = vector.load %arg6[%c0_12, %c0_13, %c0_14] : memref<3x1x32xf32, #tpu.memory_space<vmem>>, vector<1x1x32xf32>
    %16 = vector.shape_cast %15 : vector<1x1x32xf32> to vector<1x32xf32>
    %17 = vector.broadcast %16 : vector<1x32xf32> to vector<64x32xf32>
    %18 = arith.addf %14, %17 : vector<64x32xf32>
    %c1 = arith.constant 1 : index
    %c0_15 = arith.constant 0 : index
    %c0_16 = arith.constant 0 : index
    %19 = vector.load %arg4[%c1, %c0_15, %c0_16] : memref<3x32x32xbf16, #tpu.memory_space<vmem>>, vector<1x32x32xbf16>
    %20 = vector.shape_cast %19 : vector<1x32x32xbf16> to vector<32x32xbf16>
    %cst_17 = arith.constant dense<0.000000e+00> : vector<64x32xf32>
    %21 = tpu.matmul %11, %20, %cst_17 {dimension_numbers = #tpu.dot_dimension_numbers<[1], [0], [0], [1], [0, 0, 1, 1], [], []>} : vector<64x32xbf16>, vector<32x32xbf16>, vector<64x32xf32> -> vector<64x32xf32>
    %c1_18 = arith.constant 1 : index
    %c0_19 = arith.constant 0 : index
    %c0_20 = arith.constant 0 : index
    %22 = vector.load %arg6[%c1_18, %c0_19, %c0_20] : memref<3x1x32xf32, #tpu.memory_space<vmem>>, vector<1x1x32xf32>
    %23 = vector.shape_cast %22 : vector<1x1x32xf32> to vector<1x32xf32>
    %24 = vector.broadcast %23 : vector<1x32xf32> to vector<64x32xf32>
    %25 = arith.addf %21, %24 : vector<64x32xf32>
    %c2 = arith.constant 2 : index
    %c0_21 = arith.constant 0 : index
    %c0_22 = arith.constant 0 : index
    %26 = vector.load %arg4[%c2, %c0_21, %c0_22] : memref<3x32x32xbf16, #tpu.memory_space<vmem>>, vector<1x32x32xbf16>
    %27 = vector.shape_cast %26 : vector<1x32x32xbf16> to vector<32x32xbf16>
    %cst_23 = arith.constant dense<0.000000e+00> : vector<64x32xf32>
    %28 = tpu.matmul %11, %27, %cst_23 {dimension_numbers = #tpu.dot_dimension_numbers<[1], [0], [0], [1], [0, 0, 1, 1], [], []>} : vector<64x32xbf16>, vector<32x32xbf16>, vector<64x32xf32> -> vector<64x32xf32>
    %c2_24 = arith.constant 2 : index
    %c0_25 = arith.constant 0 : index
    %c0_26 = arith.constant 0 : index
    %29 = vector.load %arg6[%c2_24, %c0_25, %c0_26] : memref<3x1x32xf32, #tpu.memory_space<vmem>>, vector<1x1x32xf32>
    %30 = vector.shape_cast %29 : vector<1x1x32xf32> to vector<1x32xf32>
    %31 = vector.broadcast %30 : vector<1x32xf32> to vector<64x32xf32>
    %32 = arith.addf %28, %31 : vector<64x32xf32>
    %c0_27 = arith.constant 0 : index
    %c0_28 = arith.constant 0 : index
    %c0_29 = arith.constant 0 : index
    %33 = vector.load %arg5[%c0_27, %c0_28, %c0_29] : memref<3x32x32xbf16, #tpu.memory_space<vmem>>, vector<1x32x32xbf16>
    %34 = vector.shape_cast %33 : vector<1x32x32xbf16> to vector<32x32xbf16>
    %c1_30 = arith.constant 1 : index
    %c0_31 = arith.constant 0 : index
    %c0_32 = arith.constant 0 : index
    %35 = vector.load %arg5[%c1_30, %c0_31, %c0_32] : memref<3x32x32xbf16, #tpu.memory_space<vmem>>, vector<1x32x32xbf16>
    %36 = vector.shape_cast %35 : vector<1x32x32xbf16> to vector<32x32xbf16>
    %c2_33 = arith.constant 2 : index
    %c0_34 = arith.constant 0 : index
    %c0_35 = arith.constant 0 : index
    %37 = vector.load %arg5[%c2_33, %c0_34, %c0_35] : memref<3x32x32xbf16, #tpu.memory_space<vmem>>, vector<1x32x32xbf16>
    %38 = vector.shape_cast %37 : vector<1x32x32xbf16> to vector<32x32xbf16>
    %c0_36 = arith.constant 0 : index
    %c0_37 = arith.constant 0 : index
    %39 = vector.load %arg7[%c0_36, %c0_37] : memref<1x32xf32, #tpu.memory_space<vmem>>, vector<1x32xf32>
    %cst_38 = arith.constant 0.000000e+00 : f32
    %40 = vector.broadcast %cst_38 : f32 to vector<8x32xf32>
    %41 = arith.truncf %40 : vector<8x32xf32> to vector<8x32xbf16>
    %cst_39 = arith.constant dense<0.000000e+00> : vector<8x32xf32>
    %42 = tpu.matmul %41, %34, %cst_39 {dimension_numbers = #tpu.dot_dimension_numbers<[1], [0], [0], [1], [0, 0, 1, 1], [], []>} : vector<8x32xbf16>, vector<32x32xbf16>, vector<8x32xf32> -> vector<8x32xf32>
    %cst_40 = arith.constant dense<0.000000e+00> : vector<8x32xf32>
    %43 = tpu.matmul %41, %36, %cst_40 {dimension_numbers = #tpu.dot_dimension_numbers<[1], [0], [0], [1], [0, 0, 1, 1], [], []>} : vector<8x32xbf16>, vector<32x32xbf16>, vector<8x32xf32> -> vector<8x32xf32>
    %cst_41 = arith.constant dense<0.000000e+00> : vector<8x32xf32>
    %44 = tpu.matmul %41, %38, %cst_41 {dimension_numbers = #tpu.dot_dimension_numbers<[1], [0], [0], [1], [0, 0, 1, 1], [], []>} : vector<8x32xbf16>, vector<32x32xbf16>, vector<8x32xf32> -> vector<8x32xf32>
    %45 = vector.extract_strided_slice %18 {offsets = [0, 0], sizes = [8, 32], strides = [1, 1]} : vector<64x32xf32> to vector<8x32xf32>
    %46 = arith.addf %45, %42 : vector<8x32xf32>
    %47 = arith.negf %46 : vector<8x32xf32>
    %48 = math.exp %47 : vector<8x32xf32>
    %cst_42 = arith.constant 1.000000e+00 : f32
    %49 = vector.broadcast %cst_42 : f32 to vector<8x32xf32>
    %50 = arith.addf %49, %48 : vector<8x32xf32>
    %51 = arith.divf %49, %50 : vector<8x32xf32>
    %52 = vector.extract_strided_slice %25 {offsets = [0, 0], sizes = [8, 32], strides = [1, 1]} : vector<64x32xf32> to vector<8x32xf32>
    %53 = arith.addf %52, %43 : vector<8x32xf32>
    %54 = arith.negf %53 : vector<8x32xf32>
    %55 = math.exp %54 : vector<8x32xf32>
    %cst_43 = arith.constant 1.000000e+00 : f32
    %56 = vector.broadcast %cst_43 : f32 to vector<8x32xf32>
    %57 = arith.addf %56, %55 : vector<8x32xf32>
    %58 = arith.divf %56, %57 : vector<8x32xf32>
    %59 = vector.extract_strided_slice %32 {offsets = [0, 0], sizes = [8, 32], strides = [1, 1]} : vector<64x32xf32> to vector<8x32xf32>
    %60 = vector.broadcast %39 : vector<1x32xf32> to vector<8x32xf32>
    %61 = arith.addf %44, %60 : vector<8x32xf32>
    %62 = arith.mulf %51, %61 : vector<8x32xf32>
    %63 = arith.addf %59, %62 : vector<8x32xf32>
    %64 = math.tanh %63 : vector<8x32xf32>
    %cst_44 = arith.constant 1.000000e+00 : f32
    %65 = vector.broadcast %cst_44 : f32 to vector<8x32xf32>
    %66 = arith.subf %65, %58 : vector<8x32xf32>
    %67 = arith.mulf %66, %64 : vector<8x32xf32>
    %68 = arith.mulf %58, %40 : vector<8x32xf32>
    %69 = arith.addf %67, %68 : vector<8x32xf32>
    %c0_45 = arith.constant 0 : index
    %c0_46 = arith.constant 0 : index
    %70 = vector.load %arg11[%c0_45, %c0_46] : memref<8x256xf32, #tpu.memory_space<vmem>>, vector<8x32xf32>
    tpu.vector_store %arg11[%c0_45, %c0_46], %69 {strides = array<i32>} : memref<8x256xf32, #tpu.memory_space<vmem>>, vector<8x32xf32>,
    %71 = vector.extract_strided_slice %10 {offsets = [0, 0], sizes = [8, 32], strides = [1, 1]} : vector<64x32xf32> to vector<8x32xf32>
    %c0_47 = arith.constant 0 : index
    %c0_48 = arith.constant 0 : index
    %72 = vector.load %arg10[%c0_47, %c0_48] : memref<8x256xf32, #tpu.memory_space<vmem>>, vector<8x32xf32>
    tpu.vector_store %arg10[%c0_47, %c0_48], %71 {strides = array<i32>} : memref<8x256xf32, #tpu.memory_space<vmem>>, vector<8x32xf32>,
    %73 = arith.truncf %69 : vector<8x32xf32> to vector<8x32xbf16>
    %cst_49 = arith.constant dense<0.000000e+00> : vector<8x32xf32>
    %74 = tpu.matmul %73, %34, %cst_49 {dimension_numbers = #tpu.dot_dimension_numbers<[1], [0], [0], [1], [0, 0, 1, 1], [], []>} : vector<8x32xbf16>, vector<32x32xbf16>, vector<8x32xf32> -> vector<8x32xf32>
    %cst_50 = arith.constant dense<0.000000e+00> : vector<8x32xf32>
    %75 = tpu.matmul %73, %36, %cst_50 {dimension_numbers = #tpu.dot_dimension_numbers<[1], [0], [0], [1], [0, 0, 1, 1], [], []>} : vector<8x32xbf16>, vector<32x32xbf16>, vector<8x32xf32> -> vector<8x32xf32>
    %cst_51 = arith.constant dense<0.000000e+00> : vector<8x32xf32>
    %76 = tpu.matmul %73, %38, %cst_51 {dimension_numbers = #tpu.dot_dimension_numbers<[1], [0], [0], [1], [0, 0, 1, 1], [], []>} : vector<8x32xbf16>, vector<32x32xbf16>, vector<8x32xf32> -> vector<8x32xf32>
    %77 = vector.extract_strided_slice %18 {offsets = [8, 0], sizes = [8, 32], strides = [1, 1]} : vector<64x32xf32> to vector<8x32xf32>
    %78 = arith.addf %77, %74 : vector<8x32xf32>
    %79 = arith.negf %78 : vector<8x32xf32>
    %80 = math.exp %79 : vector<8x32xf32>
    %cst_52 = arith.constant 1.000000e+00 : f32
    %81 = vector.broadcast %cst_52 : f32 to vector<8x32xf32>
    %82 = arith.addf %81, %80 : vector<8x32xf32>
    %83 = arith.divf %81, %82 : vector<8x32xf32>
    %84 = vector.extract_strided_slice %25 {offsets = [8, 0], sizes = [8, 32], strides = [1, 1]} : vector<64x32xf32> to vector<8x32xf32>
    %85 = arith.addf %84, %75 : vector<8x32xf32>
    %86 = arith.negf %85 : vector<8x32xf32>
    %87 = math.exp %86 : vector<8x32xf32>
    %cst_53 = arith.constant 1.000000e+00 : f32
    %88 = vector.broadcast %cst_53 : f32 to vector<8x32xf32>
    %89 = arith.addf %88, %87 : vector<8x32xf32>
    %90 = arith.divf %88, %89 : vector<8x32xf32>
    %91 = vector.extract_strided_slice %32 {offsets = [8, 0], sizes = [8, 32], strides = [1, 1]} : vector<64x32xf32> to vector<8x32xf32>
    %92 = vector.broadcast %39 : vector<1x32xf32> to vector<8x32xf32>
    %93 = arith.addf %76, %92 : vector<8x32xf32>
    %94 = arith.mulf %83, %93 : vector<8x32xf32>
    %95 = arith.addf %91, %94 : vector<8x32xf32>
    %96 = math.tanh %95 : vector<8x32xf32>
    %cst_54 = arith.constant 1.000000e+00 : f32
    %97 = vector.broadcast %cst_54 : f32 to vector<8x32xf32>
    %98 = arith.subf %97, %90 : vector<8x32xf32>
    %99 = arith.mulf %98, %96 : vector<8x32xf32>
    %100 = arith.mulf %90, %69 : vector<8x32xf32>
    %101 = arith.addf %99, %100 : vector<8x32xf32>
    %c0_55 = arith.constant 0 : index
    %c32 = arith.constant 32 : index
    %102 = vector.load %arg11[%c0_55, %c32] : memref<8x256xf32, #tpu.memory_space<vmem>>, vector<8x32xf32>
    tpu.vector_store %arg11[%c0_55, %c32], %101 {strides = array<i32>} : memref<8x256xf32, #tpu.memory_space<vmem>>, vector<8x32xf32>,
    %103 = vector.extract_strided_slice %10 {offsets = [8, 0], sizes = [8, 32], strides = [1, 1]} : vector<64x32xf32> to vector<8x32xf32>
    %c0_56 = arith.constant 0 : index
    %c32_57 = arith.constant 32 : index
    %104 = vector.load %arg10[%c0_56, %c32_57] : memref<8x256xf32, #tpu.memory_space<vmem>>, vector<8x32xf32>
    tpu.vector_store %arg10[%c0_56, %c32_57], %103 {strides = array<i32>} : memref<8x256xf32, #tpu.memory_space<vmem>>, vector<8x32xf32>,
    %105 = arith.truncf %101 : vector<8x32xf32> to vector<8x32xbf16>
    %cst_58 = arith.constant dense<0.000000e+00> : vector<8x32xf32>
    %106 = tpu.matmul %105, %34, %cst_58 {dimension_numbers = #tpu.dot_dimension_numbers<[1], [0], [0], [1], [0, 0, 1, 1], [], []>} : vector<8x32xbf16>, vector<32x32xbf16>, vector<8x32xf32> -> vector<8x32xf32>
    %cst_59 = arith.constant dense<0.000000e+00> : vector<8x32xf32>
    %107 = tpu.matmul %105, %36, %cst_59 {dimension_numbers = #tpu.dot_dimension_numbers<[1], [0], [0], [1], [0, 0, 1, 1], [], []>} : vector<8x32xbf16>, vector<32x32xbf16>, vector<8x32xf32> -> vector<8x32xf32>
    %cst_60 = arith.constant dense<0.000000e+00> : vector<8x32xf32>
    %108 = tpu.matmul %105, %38, %cst_60 {dimension_numbers = #tpu.dot_dimension_numbers<[1], [0], [0], [1], [0, 0, 1, 1], [], []>} : vector<8x32xbf16>, vector<32x32xbf16>, vector<8x32xf32> -> vector<8x32xf32>
    %109 = vector.extract_strided_slice %18 {offsets = [16, 0], sizes = [8, 32], strides = [1, 1]} : vector<64x32xf32> to vector<8x32xf32>
    %110 = arith.addf %109, %106 : vector<8x32xf32>
    %111 = arith.negf %110 : vector<8x32xf32>
    %112 = math.exp %111 : vector<8x32xf32>
    %cst_61 = arith.constant 1.000000e+00 : f32
    %113 = vector.broadcast %cst_61 : f32 to vector<8x32xf32>
    %114 = arith.addf %113, %112 : vector<8x32xf32>
    %115 = arith.divf %113, %114 : vector<8x32xf32>
    %116 = vector.extract_strided_slice %25 {offsets = [16, 0], sizes = [8, 32], strides = [1, 1]} : vector<64x32xf32> to vector<8x32xf32>
    %117 = arith.addf %116, %107 : vector<8x32xf32>
    %118 = arith.negf %117 : vector<8x32xf32>
    %119 = math.exp %118 : vector<8x32xf32>
    %cst_62 = arith.constant 1.000000e+00 : f32
    %120 = vector.broadcast %cst_62 : f32 to vector<8x32xf32>
    %121 = arith.addf %120, %119 : vector<8x32xf32>
    %122 = arith.divf %120, %121 : vector<8x32xf32>
    %123 = vector.extract_strided_slice %32 {offsets = [16, 0], sizes = [8, 32], strides = [1, 1]} : vector<64x32xf32> to vector<8x32xf32>
    %124 = vector.broadcast %39 : vector<1x32xf32> to vector<8x32xf32>
    %125 = arith.addf %108, %124 : vector<8x32xf32>
    %126 = arith.mulf %115, %125 : vector<8x32xf32>
    %127 = arith.addf %123, %126 : vector<8x32xf32>
    %128 = math.tanh %127 : vector<8x32xf32>
    %cst_63 = arith.constant 1.000000e+00 : f32
    %129 = vector.broadcast %cst_63 : f32 to vector<8x32xf32>
    %130 = arith.subf %129, %122 : vector<8x32xf32>
    %131 = arith.mulf %130, %128 : vector<8x32xf32>
    %132 = arith.mulf %122, %101 : vector<8x32xf32>
    %133 = arith.addf %131, %132 : vector<8x32xf32>
    %c0_64 = arith.constant 0 : index
    %c64 = arith.constant 64 : index
    %134 = vector.load %arg11[%c0_64, %c64] : memref<8x256xf32, #tpu.memory_space<vmem>>, vector<8x32xf32>
    tpu.vector_store %arg11[%c0_64, %c64], %133 {strides = array<i32>} : memref<8x256xf32, #tpu.memory_space<vmem>>, vector<8x32xf32>,
    %135 = vector.extract_strided_slice %10 {offsets = [16, 0], sizes = [8, 32], strides = [1, 1]} : vector<64x32xf32> to vector<8x32xf32>
    %c0_65 = arith.constant 0 : index
    %c64_66 = arith.constant 64 : index
    %136 = vector.load %arg10[%c0_65, %c64_66] : memref<8x256xf32, #tpu.memory_space<vmem>>, vector<8x32xf32>
    tpu.vector_store %arg10[%c0_65, %c64_66], %135 {strides = array<i32>} : memref<8x256xf32, #tpu.memory_space<vmem>>, vector<8x32xf32>,
    %137 = arith.truncf %133 : vector<8x32xf32> to vector<8x32xbf16>
    %cst_67 = arith.constant dense<0.000000e+00> : vector<8x32xf32>
    %138 = tpu.matmul %137, %34, %cst_67 {dimension_numbers = #tpu.dot_dimension_numbers<[1], [0], [0], [1], [0, 0, 1, 1], [], []>} : vector<8x32xbf16>, vector<32x32xbf16>, vector<8x32xf32> -> vector<8x32xf32>
    %cst_68 = arith.constant dense<0.000000e+00> : vector<8x32xf32>
    %139 = tpu.matmul %137, %36, %cst_68 {dimension_numbers = #tpu.dot_dimension_numbers<[1], [0], [0], [1], [0, 0, 1, 1], [], []>} : vector<8x32xbf16>, vector<32x32xbf16>, vector<8x32xf32> -> vector<8x32xf32>
    %cst_69 = arith.constant dense<0.000000e+00> : vector<8x32xf32>
    %140 = tpu.matmul %137, %38, %cst_69 {dimension_numbers = #tpu.dot_dimension_numbers<[1], [0], [0], [1], [0, 0, 1, 1], [], []>} : vector<8x32xbf16>, vector<32x32xbf16>, vector<8x32xf32> -> vector<8x32xf32>
    %141 = vector.extract_strided_slice %18 {offsets = [24, 0], sizes = [8, 32], strides = [1, 1]} : vector<64x32xf32> to vector<8x32xf32>
    %142 = arith.addf %141, %138 : vector<8x32xf32>
    %143 = arith.negf %142 : vector<8x32xf32>
    %144 = math.exp %143 : vector<8x32xf32>
    %cst_70 = arith.constant 1.000000e+00 : f32
    %145 = vector.broadcast %cst_70 : f32 to vector<8x32xf32>
    %146 = arith.addf %145, %144 : vector<8x32xf32>
    %147 = arith.divf %145, %146 : vector<8x32xf32>
    %148 = vector.extract_strided_slice %25 {offsets = [24, 0], sizes = [8, 32], strides = [1, 1]} : vector<64x32xf32> to vector<8x32xf32>
    %149 = arith.addf %148, %139 : vector<8x32xf32>
    %150 = arith.negf %149 : vector<8x32xf32>
    %151 = math.exp %150 : vector<8x32xf32>
    %cst_71 = arith.constant 1.000000e+00 : f32
    %152 = vector.broadcast %cst_71 : f32 to vector<8x32xf32>
    %153 = arith.addf %152, %151 : vector<8x32xf32>
    %154 = arith.divf %152, %153 : vector<8x32xf32>
    %155 = vector.extract_strided_slice %32 {offsets = [24, 0], sizes = [8, 32], strides = [1, 1]} : vector<64x32xf32> to vector<8x32xf32>
    %156 = vector.broadcast %39 : vector<1x32xf32> to vector<8x32xf32>
    %157 = arith.addf %140, %156 : vector<8x32xf32>
    %158 = arith.mulf %147, %157 : vector<8x32xf32>
    %159 = arith.addf %155, %158 : vector<8x32xf32>
    %160 = math.tanh %159 : vector<8x32xf32>
    %cst_72 = arith.constant 1.000000e+00 : f32
    %161 = vector.broadcast %cst_72 : f32 to vector<8x32xf32>
    %162 = arith.subf %161, %154 : vector<8x32xf32>
    %163 = arith.mulf %162, %160 : vector<8x32xf32>
    %164 = arith.mulf %154, %133 : vector<8x32xf32>
    %165 = arith.addf %163, %164 : vector<8x32xf32>
    %c0_73 = arith.constant 0 : index
    %c96 = arith.constant 96 : index
    %166 = vector.load %arg11[%c0_73, %c96] : memref<8x256xf32, #tpu.memory_space<vmem>>, vector<8x32xf32>
    tpu.vector_store %arg11[%c0_73, %c96], %165 {strides = array<i32>} : memref<8x256xf32, #tpu.memory_space<vmem>>, vector<8x32xf32>,
    %167 = vector.extract_strided_slice %10 {offsets = [24, 0], sizes = [8, 32], strides = [1, 1]} : vector<64x32xf32> to vector<8x32xf32>
    %c0_74 = arith.constant 0 : index
    %c96_75 = arith.constant 96 : index
    %168 = vector.load %arg10[%c0_74, %c96_75] : memref<8x256xf32, #tpu.memory_space<vmem>>, vector<8x32xf32>
    tpu.vector_store %arg10[%c0_74, %c96_75], %167 {strides = array<i32>} : memref<8x256xf32, #tpu.memory_space<vmem>>, vector<8x32xf32>,
    %169 = arith.truncf %165 : vector<8x32xf32> to vector<8x32xbf16>
    %cst_76 = arith.constant dense<0.000000e+00> : vector<8x32xf32>
    %170 = tpu.matmul %169, %34, %cst_76 {dimension_numbers = #tpu.dot_dimension_numbers<[1], [0], [0], [1], [0, 0, 1, 1], [], []>} : vector<8x32xbf16>, vector<32x32xbf16>, vector<8x32xf32> -> vector<8x32xf32>
    %cst_77 = arith.constant dense<0.000000e+00> : vector<8x32xf32>
    %171 = tpu.matmul %169, %36, %cst_77 {dimension_numbers = #tpu.dot_dimension_numbers<[1], [0], [0], [1], [0, 0, 1, 1], [], []>} : vector<8x32xbf16>, vector<32x32xbf16>, vector<8x32xf32> -> vector<8x32xf32>
    %cst_78 = arith.constant dense<0.000000e+00> : vector<8x32xf32>
    %172 = tpu.matmul %169, %38, %cst_78 {dimension_numbers = #tpu.dot_dimension_numbers<[1], [0], [0], [1], [0, 0, 1, 1], [], []>} : vector<8x32xbf16>, vector<32x32xbf16>, vector<8x32xf32> -> vector<8x32xf32>
    %173 = vector.extract_strided_slice %18 {offsets = [32, 0], sizes = [8, 32], strides = [1, 1]} : vector<64x32xf32> to vector<8x32xf32>
    %174 = arith.addf %173, %170 : vector<8x32xf32>
    %175 = arith.negf %174 : vector<8x32xf32>
    %176 = math.exp %175 : vector<8x32xf32>
    %cst_79 = arith.constant 1.000000e+00 : f32
    %177 = vector.broadcast %cst_79 : f32 to vector<8x32xf32>
    %178 = arith.addf %177, %176 : vector<8x32xf32>
    %179 = arith.divf %177, %178 : vector<8x32xf32>
    %180 = vector.extract_strided_slice %25 {offsets = [32, 0], sizes = [8, 32], strides = [1, 1]} : vector<64x32xf32> to vector<8x32xf32>
    %181 = arith.addf %180, %171 : vector<8x32xf32>
    %182 = arith.negf %181 : vector<8x32xf32>
    %183 = math.exp %182 : vector<8x32xf32>
    %cst_80 = arith.constant 1.000000e+00 : f32
    %184 = vector.broadcast %cst_80 : f32 to vector<8x32xf32>
    %185 = arith.addf %184, %183 : vector<8x32xf32>
    %186 = arith.divf %184, %185 : vector<8x32xf32>
    %187 = vector.extract_strided_slice %32 {offsets = [32, 0], sizes = [8, 32], strides = [1, 1]} : vector<64x32xf32> to vector<8x32xf32>
    %188 = vector.broadcast %39 : vector<1x32xf32> to vector<8x32xf32>
    %189 = arith.addf %172, %188 : vector<8x32xf32>
    %190 = arith.mulf %179, %189 : vector<8x32xf32>
    %191 = arith.addf %187, %190 : vector<8x32xf32>
    %192 = math.tanh %191 : vector<8x32xf32>
    %cst_81 = arith.constant 1.000000e+00 : f32
    %193 = vector.broadcast %cst_81 : f32 to vector<8x32xf32>
    %194 = arith.subf %193, %186 : vector<8x32xf32>
    %195 = arith.mulf %194, %192 : vector<8x32xf32>
    %196 = arith.mulf %186, %165 : vector<8x32xf32>
    %197 = arith.addf %195, %196 : vector<8x32xf32>
    %c0_82 = arith.constant 0 : index
    %c128 = arith.constant 128 : index
    %198 = vector.load %arg11[%c0_82, %c128] : memref<8x256xf32, #tpu.memory_space<vmem>>, vector<8x32xf32>
    tpu.vector_store %arg11[%c0_82, %c128], %197 {strides = array<i32>} : memref<8x256xf32, #tpu.memory_space<vmem>>, vector<8x32xf32>,
    %199 = vector.extract_strided_slice %10 {offsets = [32, 0], sizes = [8, 32], strides = [1, 1]} : vector<64x32xf32> to vector<8x32xf32>
    %c0_83 = arith.constant 0 : index
    %c128_84 = arith.constant 128 : index
    %200 = vector.load %arg10[%c0_83, %c128_84] : memref<8x256xf32, #tpu.memory_space<vmem>>, vector<8x32xf32>
    tpu.vector_store %arg10[%c0_83, %c128_84], %199 {strides = array<i32>} : memref<8x256xf32, #tpu.memory_space<vmem>>, vector<8x32xf32>,
    %201 = arith.truncf %197 : vector<8x32xf32> to vector<8x32xbf16>
    %cst_85 = arith.constant dense<0.000000e+00> : vector<8x32xf32>
    %202 = tpu.matmul %201, %34, %cst_85 {dimension_numbers = #tpu.dot_dimension_numbers<[1], [0], [0], [1], [0, 0, 1, 1], [], []>} : vector<8x32xbf16>, vector<32x32xbf16>, vector<8x32xf32> -> vector<8x32xf32>
    %cst_86 = arith.constant dense<0.000000e+00> : vector<8x32xf32>
    %203 = tpu.matmul %201, %36, %cst_86 {dimension_numbers = #tpu.dot_dimension_numbers<[1], [0], [0], [1], [0, 0, 1, 1], [], []>} : vector<8x32xbf16>, vector<32x32xbf16>, vector<8x32xf32> -> vector<8x32xf32>
    %cst_87 = arith.constant dense<0.000000e+00> : vector<8x32xf32>
    %204 = tpu.matmul %201, %38, %cst_87 {dimension_numbers = #tpu.dot_dimension_numbers<[1], [0], [0], [1], [0, 0, 1, 1], [], []>} : vector<8x32xbf16>, vector<32x32xbf16>, vector<8x32xf32> -> vector<8x32xf32>
    %205 = vector.extract_strided_slice %18 {offsets = [40, 0], sizes = [8, 32], strides = [1, 1]} : vector<64x32xf32> to vector<8x32xf32>
    %206 = arith.addf %205, %202 : vector<8x32xf32>
    %207 = arith.negf %206 : vector<8x32xf32>
    %208 = math.exp %207 : vector<8x32xf32>
    %cst_88 = arith.constant 1.000000e+00 : f32
    %209 = vector.broadcast %cst_88 : f32 to vector<8x32xf32>
    %210 = arith.addf %209, %208 : vector<8x32xf32>
    %211 = arith.divf %209, %210 : vector<8x32xf32>
    %212 = vector.extract_strided_slice %25 {offsets = [40, 0], sizes = [8, 32], strides = [1, 1]} : vector<64x32xf32> to vector<8x32xf32>
    %213 = arith.addf %212, %203 : vector<8x32xf32>
    %214 = arith.negf %213 : vector<8x32xf32>
    %215 = math.exp %214 : vector<8x32xf32>
    %cst_89 = arith.constant 1.000000e+00 : f32
    %216 = vector.broadcast %cst_89 : f32 to vector<8x32xf32>
    %217 = arith.addf %216, %215 : vector<8x32xf32>
    %218 = arith.divf %216, %217 : vector<8x32xf32>
    %219 = vector.extract_strided_slice %32 {offsets = [40, 0], sizes = [8, 32], strides = [1, 1]} : vector<64x32xf32> to vector<8x32xf32>
    %220 = vector.broadcast %39 : vector<1x32xf32> to vector<8x32xf32>
    %221 = arith.addf %204, %220 : vector<8x32xf32>
    %222 = arith.mulf %211, %221 : vector<8x32xf32>
    %223 = arith.addf %219, %222 : vector<8x32xf32>
    %224 = math.tanh %223 : vector<8x32xf32>
    %cst_90 = arith.constant 1.000000e+00 : f32
    %225 = vector.broadcast %cst_90 : f32 to vector<8x32xf32>
    %226 = arith.subf %225, %218 : vector<8x32xf32>
    %227 = arith.mulf %226, %224 : vector<8x32xf32>
    %228 = arith.mulf %218, %197 : vector<8x32xf32>
    %229 = arith.addf %227, %228 : vector<8x32xf32>
    %c0_91 = arith.constant 0 : index
    %c160 = arith.constant 160 : index
    %230 = vector.load %arg11[%c0_91, %c160] : memref<8x256xf32, #tpu.memory_space<vmem>>, vector<8x32xf32>
    tpu.vector_store %arg11[%c0_91, %c160], %229 {strides = array<i32>} : memref<8x256xf32, #tpu.memory_space<vmem>>, vector<8x32xf32>,
    %231 = vector.extract_strided_slice %10 {offsets = [40, 0], sizes = [8, 32], strides = [1, 1]} : vector<64x32xf32> to vector<8x32xf32>
    %c0_92 = arith.constant 0 : index
    %c160_93 = arith.constant 160 : index
    %232 = vector.load %arg10[%c0_92, %c160_93] : memref<8x256xf32, #tpu.memory_space<vmem>>, vector<8x32xf32>
    tpu.vector_store %arg10[%c0_92, %c160_93], %231 {strides = array<i32>} : memref<8x256xf32, #tpu.memory_space<vmem>>, vector<8x32xf32>,
    %233 = arith.truncf %229 : vector<8x32xf32> to vector<8x32xbf16>
    %cst_94 = arith.constant dense<0.000000e+00> : vector<8x32xf32>
    %234 = tpu.matmul %233, %34, %cst_94 {dimension_numbers = #tpu.dot_dimension_numbers<[1], [0], [0], [1], [0, 0, 1, 1], [], []>} : vector<8x32xbf16>, vector<32x32xbf16>, vector<8x32xf32> -> vector<8x32xf32>
    %cst_95 = arith.constant dense<0.000000e+00> : vector<8x32xf32>
    %235 = tpu.matmul %233, %36, %cst_95 {dimension_numbers = #tpu.dot_dimension_numbers<[1], [0], [0], [1], [0, 0, 1, 1], [], []>} : vector<8x32xbf16>, vector<32x32xbf16>, vector<8x32xf32> -> vector<8x32xf32>
    %cst_96 = arith.constant dense<0.000000e+00> : vector<8x32xf32>
    %236 = tpu.matmul %233, %38, %cst_96 {dimension_numbers = #tpu.dot_dimension_numbers<[1], [0], [0], [1], [0, 0, 1, 1], [], []>} : vector<8x32xbf16>, vector<32x32xbf16>, vector<8x32xf32> -> vector<8x32xf32>
    %237 = vector.extract_strided_slice %18 {offsets = [48, 0], sizes = [8, 32], strides = [1, 1]} : vector<64x32xf32> to vector<8x32xf32>
    %238 = arith.addf %237, %234 : vector<8x32xf32>
    %239 = arith.negf %238 : vector<8x32xf32>
    %240 = math.exp %239 : vector<8x32xf32>
    %cst_97 = arith.constant 1.000000e+00 : f32
    %241 = vector.broadcast %cst_97 : f32 to vector<8x32xf32>
    %242 = arith.addf %241, %240 : vector<8x32xf32>
    %243 = arith.divf %241, %242 : vector<8x32xf32>
    %244 = vector.extract_strided_slice %25 {offsets = [48, 0], sizes = [8, 32], strides = [1, 1]} : vector<64x32xf32> to vector<8x32xf32>
    %245 = arith.addf %244, %235 : vector<8x32xf32>
    %246 = arith.negf %245 : vector<8x32xf32>
    %247 = math.exp %246 : vector<8x32xf32>
    %cst_98 = arith.constant 1.000000e+00 : f32
    %248 = vector.broadcast %cst_98 : f32 to vector<8x32xf32>
    %249 = arith.addf %248, %247 : vector<8x32xf32>
    %250 = arith.divf %248, %249 : vector<8x32xf32>
    %251 = vector.extract_strided_slice %32 {offsets = [48, 0], sizes = [8, 32], strides = [1, 1]} : vector<64x32xf32> to vector<8x32xf32>
    %252 = vector.broadcast %39 : vector<1x32xf32> to vector<8x32xf32>
    %253 = arith.addf %236, %252 : vector<8x32xf32>
    %254 = arith.mulf %243, %253 : vector<8x32xf32>
    %255 = arith.addf %251, %254 : vector<8x32xf32>
    %256 = math.tanh %255 : vector<8x32xf32>
    %cst_99 = arith.constant 1.000000e+00 : f32
    %257 = vector.broadcast %cst_99 : f32 to vector<8x32xf32>
    %258 = arith.subf %257, %250 : vector<8x32xf32>
    %259 = arith.mulf %258, %256 : vector<8x32xf32>
    %260 = arith.mulf %250, %229 : vector<8x32xf32>
    %261 = arith.addf %259, %260 : vector<8x32xf32>
    %c0_100 = arith.constant 0 : index
    %c192 = arith.constant 192 : index
    %262 = vector.load %arg11[%c0_100, %c192] : memref<8x256xf32, #tpu.memory_space<vmem>>, vector<8x32xf32>
    tpu.vector_store %arg11[%c0_100, %c192], %261 {strides = array<i32>} : memref<8x256xf32, #tpu.memory_space<vmem>>, vector<8x32xf32>,
    %263 = vector.extract_strided_slice %10 {offsets = [48, 0], sizes = [8, 32], strides = [1, 1]} : vector<64x32xf32> to vector<8x32xf32>
    %c0_101 = arith.constant 0 : index
    %c192_102 = arith.constant 192 : index
    %264 = vector.load %arg10[%c0_101, %c192_102] : memref<8x256xf32, #tpu.memory_space<vmem>>, vector<8x32xf32>
    tpu.vector_store %arg10[%c0_101, %c192_102], %263 {strides = array<i32>} : memref<8x256xf32, #tpu.memory_space<vmem>>, vector<8x32xf32>,
    %265 = arith.truncf %261 : vector<8x32xf32> to vector<8x32xbf16>
    %cst_103 = arith.constant dense<0.000000e+00> : vector<8x32xf32>
    %266 = tpu.matmul %265, %34, %cst_103 {dimension_numbers = #tpu.dot_dimension_numbers<[1], [0], [0], [1], [0, 0, 1, 1], [], []>} : vector<8x32xbf16>, vector<32x32xbf16>, vector<8x32xf32> -> vector<8x32xf32>
    %cst_104 = arith.constant dense<0.000000e+00> : vector<8x32xf32>
    %267 = tpu.matmul %265, %36, %cst_104 {dimension_numbers = #tpu.dot_dimension_numbers<[1], [0], [0], [1], [0, 0, 1, 1], [], []>} : vector<8x32xbf16>, vector<32x32xbf16>, vector<8x32xf32> -> vector<8x32xf32>
    %cst_105 = arith.constant dense<0.000000e+00> : vector<8x32xf32>
    %268 = tpu.matmul %265, %38, %cst_105 {dimension_numbers = #tpu.dot_dimension_numbers<[1], [0], [0], [1], [0, 0, 1, 1], [], []>} : vector<8x32xbf16>, vector<32x32xbf16>, vector<8x32xf32> -> vector<8x32xf32>
    %269 = vector.extract_strided_slice %18 {offsets = [56, 0], sizes = [8, 32], strides = [1, 1]} : vector<64x32xf32> to vector<8x32xf32>
    %270 = arith.addf %269, %266 : vector<8x32xf32>
    %271 = arith.negf %270 : vector<8x32xf32>
    %272 = math.exp %271 : vector<8x32xf32>
    %cst_106 = arith.constant 1.000000e+00 : f32
    %273 = vector.broadcast %cst_106 : f32 to vector<8x32xf32>
    %274 = arith.addf %273, %272 : vector<8x32xf32>
    %275 = arith.divf %273, %274 : vector<8x32xf32>
    %276 = vector.extract_strided_slice %25 {offsets = [56, 0], sizes = [8, 32], strides = [1, 1]} : vector<64x32xf32> to vector<8x32xf32>
    %277 = arith.addf %276, %267 : vector<8x32xf32>
    %278 = arith.negf %277 : vector<8x32xf32>
    %279 = math.exp %278 : vector<8x32xf32>
    %cst_107 = arith.constant 1.000000e+00 : f32
    %280 = vector.broadcast %cst_107 : f32 to vector<8x32xf32>
    %281 = arith.addf %280, %279 : vector<8x32xf32>
    %282 = arith.divf %280, %281 : vector<8x32xf32>
    %283 = vector.extract_strided_slice %32 {offsets = [56, 0], sizes = [8, 32], strides = [1, 1]} : vector<64x32xf32> to vector<8x32xf32>
    %284 = vector.broadcast %39 : vector<1x32xf32> to vector<8x32xf32>
    %285 = arith.addf %268, %284 : vector<8x32xf32>
    %286 = arith.mulf %275, %285 : vector<8x32xf32>
    %287 = arith.addf %283, %286 : vector<8x32xf32>
    %288 = math.tanh %287 : vector<8x32xf32>
    %cst_108 = arith.constant 1.000000e+00 : f32
    %289 = vector.broadcast %cst_108 : f32 to vector<8x32xf32>
    %290 = arith.subf %289, %282 : vector<8x32xf32>
    %291 = arith.mulf %290, %288 : vector<8x32xf32>
    %292 = arith.mulf %282, %261 : vector<8x32xf32>
    %293 = arith.addf %291, %292 : vector<8x32xf32>
    %c0_109 = arith.constant 0 : index
    %c224 = arith.constant 224 : index
    %294 = vector.load %arg11[%c0_109, %c224] : memref<8x256xf32, #tpu.memory_space<vmem>>, vector<8x32xf32>
    tpu.vector_store %arg11[%c0_109, %c224], %293 {strides = array<i32>} : memref<8x256xf32, #tpu.memory_space<vmem>>, vector<8x32xf32>,
    %295 = vector.extract_strided_slice %10 {offsets = [56, 0], sizes = [8, 32], strides = [1, 1]} : vector<64x32xf32> to vector<8x32xf32>
    %c0_110 = arith.constant 0 : index
    %c224_111 = arith.constant 224 : index
    %296 = vector.load %arg10[%c0_110, %c224_111] : memref<8x256xf32, #tpu.memory_space<vmem>>, vector<8x32xf32>
    tpu.vector_store %arg10[%c0_110, %c224_111], %295 {strides = array<i32>} : memref<8x256xf32, #tpu.memory_space<vmem>>, vector<8x32xf32>,
    %297 = arith.truncf %293 : vector<8x32xf32> to vector<8x32xbf16>
    %c0_112 = arith.constant 0 : index
    %c0_113 = arith.constant 0 : index
    %298 = vector.load %arg8[%c0_112, %c0_113] : memref<32x4xbf16, #tpu.memory_space<vmem>>, vector<32x4xbf16>
    %cst_114 = arith.constant dense<0.000000e+00> : vector<8x4xf32>
    %299 = tpu.matmul %297, %298, %cst_114 {dimension_numbers = #tpu.dot_dimension_numbers<[1], [0], [0], [1], [0, 0, 1, 1], [], []>} : vector<8x32xbf16>, vector<32x4xbf16>, vector<8x4xf32> -> vector<8x4xf32>
    %c0_115 = arith.constant 0 : index
    %c0_116 = arith.constant 0 : index
    %300 = vector.load %arg9[%c0_115, %c0_116] : memref<1x4xf32, #tpu.memory_space<vmem>>, vector<1x4xf32>
    %301 = vector.broadcast %300 : vector<1x4xf32> to vector<8x4xf32>
    %302 = arith.addf %299, %301 : vector<8x4xf32>
    %cst_117 = arith.constant dense<0xFF800000> : vector<8xf32>
    %303 = vector.multi_reduction <maximumf>, %302, %cst_117 [1] : vector<8x4xf32> to vector<8xf32>
    %304 = vector.shape_cast %303 : vector<8xf32> to vector<8x1xf32>
    %305 = vector.broadcast %304 : vector<8x1xf32> to vector<8x4xf32>
    %306 = arith.subf %302, %305 : vector<8x4xf32>
    %307 = math.exp %306 : vector<8x4xf32>
    %cst_118 = arith.constant dense<0.000000e+00> : vector<8xf32>
    %308 = vector.multi_reduction <add>, %307, %cst_118 [1] : vector<8x4xf32> to vector<8xf32>
    %309 = vector.shape_cast %308 : vector<8xf32> to vector<8x1xf32>
    %310 = tpu.reciprocal %309 {approx = true} : vector<8x1xf32> -> vector<8x1xf32>
    %311 = vector.broadcast %310 : vector<8x1xf32> to vector<8x4xf32>
    %312 = arith.mulf %307, %311 : vector<8x4xf32>
    %c0_119 = arith.constant 0 : index
    %c0_120 = arith.constant 0 : index
    %313 = vector.load %arg12[%c0_119, %c0_120] : memref<8x8xf32, #tpu.memory_space<vmem>>, vector<8x4xf32>
    tpu.vector_store %arg12[%c0_119, %c0_120], %312 {strides = array<i32>} : memref<8x8xf32, #tpu.memory_space<vmem>>, vector<8x4xf32>,
    %c0_121 = arith.constant 0 : index
    %c4 = arith.constant 4 : index
    %314 = vector.load %arg12[%c0_121, %c4] : memref<8x8xf32, #tpu.memory_space<vmem>>, vector<8x4xf32>
    tpu.vector_store %arg12[%c0_121, %c4], %302 {strides = array<i32>} : memref<8x8xf32, #tpu.memory_space<vmem>>, vector<8x4xf32>,
    return
  }
}

</mosaic_0001>

<llo_original>
// kernel: rnn_forward.1
$region0: #{rnn_forward.1}
  #allocation0 [shape = 'u32[]', space=smem, size = 0x4, offset = 0x4, fixed_abs, tag = 'smem constant byte address 0x4 - core index']
  #allocation1 [shape = 'u32[144,128]{1,0:T(1,128)}', space=vmem, size = 0x12000, scoped, tag = 'internal scratch']
  %s0 = inlined_call_operand.vmem [shape: bf16[64,20], index: 0, kind: input, shape index: {}]
  %s1 = inlined_call_operand.vmem [shape: bf16[8,12], index: 1, kind: input, shape index: {}]
  %s2 = inlined_call_operand.vmem [shape: bf16[20,32], index: 2, kind: input, shape index: {}]
  %s3 = inlined_call_operand.vmem [shape: bf16[12,32], index: 3, kind: input, shape index: {}]
  %s4 = inlined_call_operand.vmem [shape: bf16[3,32,32], index: 4, kind: input, shape index: {}]
  %s5 = inlined_call_operand.vmem [shape: bf16[3,32,32], index: 5, kind: input, shape index: {}]
  %s6 = inlined_call_operand.vmem [shape: f32[3,1,32], index: 6, kind: input, shape index: {}]
  %s7 = inlined_call_operand.vmem [shape: f32[1,32], index: 7, kind: input, shape index: {}]
  %s8 = inlined_call_operand.vmem [shape: bf16[32,4], index: 8, kind: input, shape index: {}]
  %s9 = inlined_call_operand.vmem [shape: f32[1,4], index: 9, kind: input, shape index: {}]
  %s10 = inlined_call_operand.vmem [shape: f32[8,256], index: 10, kind: output, shape index: {0}]
  %s11 = inlined_call_operand.vmem [shape: f32[8,256], index: 11, kind: output, shape index: {1}]
  %s12 = inlined_call_operand.vmem [shape: f32[8,8], index: 12, kind: output, shape index: {2}]
  %13 = xla_tuple %s10, %s11, %s12
  %s14 = sld [smem:[#allocation0]]
  $region66: #{rnn_forward.1} parent=0
    _
  %s16 = ssub.s32 1, %s14
  %s17 = scalar_select 0, %s16, %s14
  // Predicated region
  $region2: #{rnn_forward.1} parent=0 // pred_check
    _
  $region3: #{rnn_forward.1} parent=0 // pred_check_branch
    %19 = sbr.rel (0) target = $region5
  $region4: #{rnn_forward.1} parent=0 // pred_region
    _
  $region5: #{rnn_forward.1} parent=0 // pred_fallthru
    _
  // Predicated region
  $region6: #{rnn_forward.1} parent=0 // pred_check
    _
  $region7: #{rnn_forward.1} parent=0 // pred_check_branch
    %21 = sbr.rel (0) target = $region9
  $region8: #{rnn_forward.1} parent=0 // pred_region
    _
  $region9: #{rnn_forward.1} parent=0 // pred_fallthru
    _
  // Predicated region
  $region10: #{rnn_forward.1} parent=0 // pred_check
    _
  $region11: #{rnn_forward.1} parent=0 // pred_check_branch
    %23 = sbr.rel (0) target = $region13
  $region12: #{rnn_forward.1} parent=0 // pred_region
    _
  $region13: #{rnn_forward.1} parent=0 // pred_fallthru
    _
  // Predicated region
  $region14: #{rnn_forward.1} parent=0 // pred_check
    _
  $region15: #{rnn_forward.1} parent=0 // pred_check_branch
    %25 = sbr.rel (0) target = $region17
  $region16: #{rnn_forward.1} parent=0 // pred_region
    _
  $region17: #{rnn_forward.1} parent=0 // pred_fallthru
    _
  // Predicated region
  $region18: #{rnn_forward.1} parent=0 // pred_check
    _
  $region19: #{rnn_forward.1} parent=0 // pred_check_branch
    %27 = sbr.rel (0) target = $region21
  $region20: #{rnn_forward.1} parent=0 // pred_region
    _
  $region21: #{rnn_forward.1} parent=0 // pred_fallthru
    _
  // Predicated region
  $region22: #{rnn_forward.1} parent=0 // pred_check
    _
  $region23: #{rnn_forward.1} parent=0 // pred_check_branch
    %29 = sbr.rel (0) target = $region25
  $region24: #{rnn_forward.1} parent=0 // pred_region
    _
  $region25: #{rnn_forward.1} parent=0 // pred_fallthru
    _
  // Predicated region
  $region26: #{rnn_forward.1} parent=0 // pred_check
    _
  $region27: #{rnn_forward.1} parent=0 // pred_check_branch
    %31 = sbr.rel (0) target = $region29
  $region28: #{rnn_forward.1} parent=0 // pred_region
    _
  $region29: #{rnn_forward.1} parent=0 // pred_fallthru
    _
  // Predicated region
  $region30: #{rnn_forward.1} parent=0 // pred_check
    _
  $region31: #{rnn_forward.1} parent=0 // pred_check_branch
    %33 = sbr.rel (0) target = $region33
  $region32: #{rnn_forward.1} parent=0 // pred_region
    _
  $region33: #{rnn_forward.1} parent=0 // pred_fallthru
    _
  // Predicated region
  $region34: #{rnn_forward.1} parent=0 // pred_check
    _
  $region35: #{rnn_forward.1} parent=0 // pred_check_branch
    %35 = sbr.rel (0) target = $region37
  $region36: #{rnn_forward.1} parent=0 // pred_region
    _
  $region37: #{rnn_forward.1} parent=0 // pred_fallthru
    _
  // Predicated region
  $region38: #{rnn_forward.1} parent=0 // pred_check
    _
  $region39: #{rnn_forward.1} parent=0 // pred_check_branch
    %37 = sbr.rel (0) target = $region41
  $region40: #{rnn_forward.1} parent=0 // pred_region
    _
  $region41: #{rnn_forward.1} parent=0 // pred_fallthru
    _
  %v39 = vld [vmem:[%s1] sm:$0xf]
  %v40 = vld [vmem:[%s3] sm:$0xf]
  %v41 = vld [vmem:[%s3 + $0x4] sm:$0x3]
  %v44 = vunpack.c.l.b16 %v40
  %v45 = vunpack.c.l.b16 %v41
  %v46 = vpack.c.b16 %v45, %v44
  %vm47 = vcmask 97280
  %v49 = vsel %vm47, %v39, 0
  %vm51 = vcmask 1045504
  %v53 = vsel %vm51, %v46, 0
  %55 = vmatprep.subr.bf16.mxu0 0
  %56 = vmatpush1.bf16.msra.mxu0 %v53
  %57 = vmatprep.subr.bf16.mxu0 0
  %58 = vmatpush1.bf16.msra.mxu0 0
  %59 = vmatprep.subr.bf16.mxu0 0
  %60 = vmatpush1.bf16.msra.mxu0 0
  %61 = vmatprep.subr.bf16.mxu0 0
  %62 = vmatpush1.bf16.msra.mxu0 0
  %63 = vmatprep.subr.bf16.mxu0 0
  %64 = vmatpush1.bf16.msra.mxu0 0
  %65 = vmatprep.subr.bf16.mxu0 0
  %66 = vmatpush1.bf16.msra.mxu0 0
  %67 = vmatprep.subr.bf16.mxu0 0
  %68 = vmatpush1.bf16.msra.mxu0 0
  %69 = vmatprep.subr.bf16.mxu0 0
  %70 = vmatpush1.bf16.msra.mxu0 0
  %71 = vmatprep.subr.bf16.mxu0 0
  %72 = vmatpush1.bf16.msra.mxu0 0
  %73 = vmatprep.subr.bf16.mxu0 0
  %74 = vmatpush1.bf16.msra.mxu0 0
  %75 = vmatprep.subr.bf16.mxu0 0
  %76 = vmatpush1.bf16.msra.mxu0 0
  %77 = vmatprep.subr.bf16.mxu0 0
  %78 = vmatpush1.bf16.msra.mxu0 0
  %79 = vmatprep.subr.bf16.mxu0 0
  %80 = vmatpush1.bf16.msra.mxu0 0
  %81 = vmatprep.subr.bf16.mxu0 0
  %82 = vmatpush1.bf16.msra.mxu0 0
  %83 = vmatprep.subr.bf16.mxu0 0
  %84 = vmatpush1.bf16.msra.mxu0 0
  %85 = vmatprep.subr.bf16.mxu0 0
  %86 = vmatpush1.bf16.msra.mxu0 0
  %87 = vmatprep.mubr.bf16.mxu0 0
  %88 = vmatmul.mubr.bf16.gmra.mrb[0].mxu0 %v49
  %v89 = vpop.f32.mrb[0].mxu0
  %v90 = vadd.f32 0.0, %v89
  %v91 = vpop.f32.mrb[0].mxu0
  %v92 = vpop.f32.mrb[0].mxu0
  %v93 = vpop.f32.mrb[0].mxu0
  %94 = vdwg.mxu0
  %v95 = vld [vmem:[%s0] sm:$0xf]
  %v96 = vld [vmem:[%s0 + $0x4] sm:$0xf]
  %v97 = vld [vmem:[%s0 + $0x8] sm:$0xf]
  %v98 = vld [vmem:[%s0 + $0xc] sm:$0xf]
  %v99 = vld [vmem:[%s0 + $0x10] sm:$0xf]
  %v100 = vld [vmem:[%s0 + $0x14] sm:$0xf]
  %v101 = vld [vmem:[%s0 + $0x18] sm:$0xf]
  %v102 = vld [vmem:[%s0 + $0x1c] sm:$0xf]
  %v103 = vld [vmem:[%s2] sm:$0xf]
  %v104 = vld [vmem:[%s2 + $0x4] sm:$0xf]
  %v105 = vld [vmem:[%s2 + $0x8] sm:$0x3]
  %v114 = vunpack.c.l.b16 %v95
  %v115 = vunpack.c.l.b16 %v96
  %v116 = vunpack.c.l.b16 %v97
  %v117 = vunpack.c.l.b16 %v98
  %v118 = vunpack.c.l.b16 %v99
  %v119 = vunpack.c.l.b16 %v100
  %v120 = vunpack.c.l.b16 %v101
  %v121 = vunpack.c.l.b16 %v102
  %v122 = vpack.c.b16 %v115, %v114
  %v123 = vpack.c.b16 %v117, %v116
  %v124 = vpack.c.b16 %v119, %v118
  %v125 = vpack.c.b16 %v121, %v120
  %v129 = vunpack.c.l.b16 %v103
  %v130 = vunpack.c.l.b16 %v104
  %v131 = vunpack.c.l.b16 %v105
  %v132 = vpack.c.b16 %v130, %v129
  %v133 = vpack.c.b16 %v131, %v131
  %vm135 = vcmask 162816
  %v137 = vsel %vm135, %v122, 0
  %v140 = vsel %vm135, %v123, 0
  %v143 = vsel %vm135, %v124, 0
  %v146 = vsel %vm135, %v125, 0
  %vm148 = vcmask 1041408
  %v150 = vsel %vm148, %v133, 0
  %152 = vmatprep.subr.bf16.mxu0 0
  %153 = vmatpush1.bf16.msra.mxu0 %v132
  %154 = vmatprep.subr.bf16.mxu0 0
  %155 = vmatpush1.bf16.msra.mxu0 %v150
  %156 = vmatprep.subr.bf16.mxu0 0
  %157 = vmatpush1.bf16.msra.mxu0 0
  %158 = vmatprep.subr.bf16.mxu0 0
  %159 = vmatpush1.bf16.msra.mxu0 0
  %160 = vmatprep.subr.bf16.mxu0 0
  %161 = vmatpush1.bf16.msra.mxu0 0
  %162 = vmatprep.subr.bf16.mxu0 0
  %163 = vmatpush1.bf16.msra.mxu0 0
  %164 = vmatprep.subr.bf16.mxu0 0
  %165 = vmatpush1.bf16.msra.mxu0 0
  %166 = vmatprep.subr.bf16.mxu0 0
  %167 = vmatpush1.bf16.msra.mxu0 0
  %168 = vmatprep.subr.bf16.mxu0 0
  %169 = vmatpush1.bf16.msra.mxu0 0
  %170 = vmatprep.subr.bf16.mxu0 0
  %171 = vmatpush1.bf16.msra.mxu0 0
  %172 = vmatprep.subr.bf16.mxu0 0
  %173 = vmatpush1.bf16.msra.mxu0 0
  %174 = vmatprep.subr.bf16.mxu0 0
  %175 = vmatpush1.bf16.msra.mxu0 0
  %176 = vmatprep.subr.bf16.mxu0 0
  %177 = vmatpush1.bf16.msra.mxu0 0
  %178 = vmatprep.subr.bf16.mxu0 0
  %179 = vmatpush1.bf16.msra.mxu0 0
  %180 = vmatprep.subr.bf16.mxu0 0
  %181 = vmatpush1.bf16.msra.mxu0 0
  %182 = vmatprep.subr.bf16.mxu0 0
  %183 = vmatpush1.bf16.msra.mxu0 0
  %184 = vmatprep.mubr.bf16.mxu0 0
  %185 = vmatmul.mubr.bf16.gmra.mrb[0].mxu0 %v137
  %v186 = vpop.f32.mrb[0].mxu0
  %v187 = vadd.f32 0.0, %v186
  %v188 = vpop.f32.mrb[0].mxu0
  %v189 = vpop.f32.mrb[0].mxu0
  %v190 = vadd.f32 0.0, %v189
  %v191 = vpop.f32.mrb[0].mxu0
  %192 = vmatprep.mubr.bf16.mxu0 0
  %193 = vmatmul.mubr.bf16.gmra.mrb[0].mxu0 %v140
  %v194 = vpop.f32.mrb[0].mxu0
  %v195 = vadd.f32 0.0, %v194
  %v196 = vpop.f32.mrb[0].mxu0
  %v197 = vpop.f32.mrb[0].mxu0
  %v198 = vadd.f32 0.0, %v197
  %v199 = vpop.f32.mrb[0].mxu0
  %200 = vmatprep.mubr.bf16.mxu0 0
  %201 = vmatmul.mubr.bf16.gmra.mrb[0].mxu0 %v143
  %v202 = vpop.f32.mrb[0].mxu0
  %v203 = vadd.f32 0.0, %v202
  %v204 = vpop.f32.mrb[0].mxu0
  %v205 = vpop.f32.mrb[0].mxu0
  %v206 = vadd.f32 0.0, %v205
  %v207 = vpop.f32.mrb[0].mxu0
  %208 = vmatprep.mubr.bf16.mxu0 0
  %209 = vmatmul.mubr.bf16.gmra.mrb[0].mxu0 %v146
  %v210 = vpop.f32.mrb[0].mxu0
  %v211 = vadd.f32 0.0, %v210
  %v212 = vpop.f32.mrb[0].mxu0
  %v213 = vpop.f32.mrb[0].mxu0
  %v214 = vadd.f32 0.0, %v213
  %v215 = vpop.f32.mrb[0].mxu0
  %216 = vdwg.mxu0
  %v217 = vadd.f32 %v187, %v90
  %v218 = vadd.f32 %v190, %v90
  %v219 = vadd.f32 %v195, %v90
  %v220 = vadd.f32 %v198, %v90
  %v221 = vadd.f32 %v203, %v90
  %v222 = vadd.f32 %v206, %v90
  %v223 = vadd.f32 %v211, %v90
  %v224 = vadd.f32 %v214, %v90
  %v225 = vpack.c.bf16 %v218, %v217
  %v226 = vpack.c.bf16 %v220, %v219
  %v227 = vpack.c.bf16 %v222, %v221
  %v228 = vpack.c.bf16 %v224, %v223
  %v229 = vld [vmem:[%s4] sm:$0xf]
  %v230 = vld [vmem:[%s4 + $0x4] sm:$0xf]
  %v231 = vld [vmem:[%s4 + $0x8] sm:$0xf]
  %v232 = vld [vmem:[%s4 + $0xc] sm:$0xf]
  %v233 = vld [vmem:[%s6] sm:$0x1]
  %v235 = vlaneseq
  %v236 = vshrl.u32 %v235, 7
  %v237 = vsub.s32 0, %v236
  %v238 = vrot.slane %v233, %v237
  %v244 = vunpack.c.l.b16 %v229
  %v245 = vunpack.c.l.b16 %v230
  %v246 = vunpack.c.l.b16 %v231
  %v247 = vunpack.c.l.b16 %v232
  %v248 = vpack.c.b16 %v245, %v244
  %v249 = vpack.c.b16 %v247, %v246
  %vm252 = vcmask 261120
  %v254 = vsel %vm252, %v225, 0
  %v257 = vsel %vm252, %v226, 0
  %v260 = vsel %vm252, %v227, 0
  %v263 = vsel %vm252, %v228, 0
  %265 = vmatprep.subr.bf16.mxu0 0
  %266 = vmatpush1.bf16.msra.mxu0 %v248
  %267 = vmatprep.subr.bf16.mxu0 0
  %268 = vmatpush1.bf16.msra.mxu0 %v249
  %269 = vmatprep.subr.bf16.mxu0 0
  %270 = vmatpush1.bf16.msra.mxu0 0
  %271 = vmatprep.subr.bf16.mxu0 0
  %272 = vmatpush1.bf16.msra.mxu0 0
  %273 = vmatprep.subr.bf16.mxu0 0
  %274 = vmatpush1.bf16.msra.mxu0 0
  %275 = vmatprep.subr.bf16.mxu0 0
  %276 = vmatpush1.bf16.msra.mxu0 0
  %277 = vmatprep.subr.bf16.mxu0 0
  %278 = vmatpush1.bf16.msra.mxu0 0
  %279 = vmatprep.subr.bf16.mxu0 0
  %280 = vmatpush1.bf16.msra.mxu0 0
  %281 = vmatprep.subr.bf16.mxu0 0
  %282 = vmatpush1.bf16.msra.mxu0 0
  %283 = vmatprep.subr.bf16.mxu0 0
  %284 = vmatpush1.bf16.msra.mxu0 0
  %285 = vmatprep.subr.bf16.mxu0 0
  %286 = vmatpush1.bf16.msra.mxu0 0
  %287 = vmatprep.subr.bf16.mxu0 0
  %288 = vmatpush1.bf16.msra.mxu0 0
  %289 = vmatprep.subr.bf16.mxu0 0
  %290 = vmatpush1.bf16.msra.mxu0 0
  %291 = vmatprep.subr.bf16.mxu0 0
  %292 = vmatpush1.bf16.msra.mxu0 0
  %293 = vmatprep.subr.bf16.mxu0 0
  %294 = vmatpush1.bf16.msra.mxu0 0
  %295 = vmatprep.subr.bf16.mxu0 0
  %296 = vmatpush1.bf16.msra.mxu0 0
  %297 = vmatprep.mubr.bf16.mxu0 0
  %298 = vmatmul.mubr.bf16.gmra.mrb[0].mxu0 %v254
  %v299 = vpop.f32.mrb[0].mxu0
  %v300 = vadd.f32 %v238, %v299
  %v301 = vpop.f32.mrb[0].mxu0
  %v302 = vpop.f32.mrb[0].mxu0
  %v303 = vadd.f32 %v238, %v302
  %v304 = vpop.f32.mrb[0].mxu0
  %305 = vmatprep.mubr.bf16.mxu0 0
  %306 = vmatmul.mubr.bf16.gmra.mrb[0].mxu0 %v257
  %v307 = vpop.f32.mrb[0].mxu0
  %v308 = vadd.f32 %v238, %v307
  %v309 = vpop.f32.mrb[0].mxu0
  %v310 = vpop.f32.mrb[0].mxu0
  %v311 = vadd.f32 %v238, %v310
  %v312 = vpop.f32.mrb[0].mxu0
  %313 = vmatprep.mubr.bf16.mxu0 0
  %314 = vmatmul.mubr.bf16.gmra.mrb[0].mxu0 %v260
  %v315 = vpop.f32.mrb[0].mxu0
  %v316 = vadd.f32 %v238, %v315
  %v317 = vpop.f32.mrb[0].mxu0
  %v318 = vpop.f32.mrb[0].mxu0
  %v319 = vadd.f32 %v238, %v318
  %v320 = vpop.f32.mrb[0].mxu0
  %321 = vmatprep.mubr.bf16.mxu0 0
  %322 = vmatmul.mubr.bf16.gmra.mrb[0].mxu0 %v263
  %v323 = vpop.f32.mrb[0].mxu0
  %v324 = vadd.f32 %v238, %v323
  %v325 = vpop.f32.mrb[0].mxu0
  %v326 = vpop.f32.mrb[0].mxu0
  %v327 = vadd.f32 %v238, %v326
  %v328 = vpop.f32.mrb[0].mxu0
  %329 = vdwg.mxu0
  %s330 = scalar_lea.vmem %s4, 16
  %v331 = vld [vmem:[%s330] sm:$0xf]
  %v332 = vld [vmem:[%s330 + $0x4] sm:$0xf]
  %v333 = vld [vmem:[%s330 + $0x8] sm:$0xf]
  %v334 = vld [vmem:[%s330 + $0xc] sm:$0xf]
  %s335 = scalar_lea.vmem %s6, 1
  %v336 = vld [vmem:[%s335] sm:$0x1]
  %v338 = vlaneseq
  %v339 = vshrl.u32 %v338, 7
  %v340 = vsub.s32 0, %v339
  %v341 = vrot.slane %v336, %v340
  %v347 = vunpack.c.l.b16 %v331
  %v348 = vunpack.c.l.b16 %v332
  %v349 = vunpack.c.l.b16 %v333
  %v350 = vunpack.c.l.b16 %v334
  %v351 = vpack.c.b16 %v348, %v347
  %v352 = vpack.c.b16 %v350, %v349
  %355 = vmatprep.subr.bf16.mxu0 0
  %356 = vmatpush1.bf16.msra.mxu0 %v351
  %357 = vmatprep.subr.bf16.mxu0 0
  %358 = vmatpush1.bf16.msra.mxu0 %v352
  %359 = vmatprep.subr.bf16.mxu0 0
  %360 = vmatpush1.bf16.msra.mxu0 0
  %361 = vmatprep.subr.bf16.mxu0 0
  %362 = vmatpush1.bf16.msra.mxu0 0
  %363 = vmatprep.subr.bf16.mxu0 0
  %364 = vmatpush1.bf16.msra.mxu0 0
  %365 = vmatprep.subr.bf16.mxu0 0
  %366 = vmatpush1.bf16.msra.mxu0 0
  %367 = vmatprep.subr.bf16.mxu0 0
  %368 = vmatpush1.bf16.msra.mxu0 0
  %369 = vmatprep.subr.bf16.mxu0 0
  %370 = vmatpush1.bf16.msra.mxu0 0
  %371 = vmatprep.subr.bf16.mxu0 0
  %372 = vmatpush1.bf16.msra.mxu0 0
  %373 = vmatprep.subr.bf16.mxu0 0
  %374 = vmatpush1.bf16.msra.mxu0 0
  %375 = vmatprep.subr.bf16.mxu0 0
  %376 = vmatpush1.bf16.msra.mxu0 0
  %377 = vmatprep.subr.bf16.mxu0 0
  %378 = vmatpush1.bf16.msra.mxu0 0
  %379 = vmatprep.subr.bf16.mxu0 0
  %380 = vmatpush1.bf16.msra.mxu0 0
  %381 = vmatprep.subr.bf16.mxu0 0
  %382 = vmatpush1.bf16.msra.mxu0 0
  %383 = vmatprep.subr.bf16.mxu0 0
  %384 = vmatpush1.bf16.msra.mxu0 0
  %385 = vmatprep.subr.bf16.mxu0 0
  %386 = vmatpush1.bf16.msra.mxu0 0
  %387 = vmatprep.mubr.bf16.mxu0 0
  %388 = vmatmul.mubr.bf16.gmra.mrb[0].mxu0 %v254
  %v389 = vpop.f32.mrb[0].mxu0
  %v390 = vadd.f32 %v341, %v389
  %v391 = vpop.f32.mrb[0].mxu0
  %v392 = vpop.f32.mrb[0].mxu0
  %v393 = vadd.f32 %v341, %v392
  %v394 = vpop.f32.mrb[0].mxu0
  %395 = vmatprep.mubr.bf16.mxu0 0
  %396 = vmatmul.mubr.bf16.gmra.mrb[0].mxu0 %v257
  %v397 = vpop.f32.mrb[0].mxu0
  %v398 = vadd.f32 %v341, %v397
  %v399 = vpop.f32.mrb[0].mxu0
  %v400 = vpop.f32.mrb[0].mxu0
  %v401 = vadd.f32 %v341, %v400
  %v402 = vpop.f32.mrb[0].mxu0
  %403 = vmatprep.mubr.bf16.mxu0 0
  %404 = vmatmul.mubr.bf16.gmra.mrb[0].mxu0 %v260
  %v405 = vpop.f32.mrb[0].mxu0
  %v406 = vadd.f32 %v341, %v405
  %v407 = vpop.f32.mrb[0].mxu0
  %v408 = vpop.f32.mrb[0].mxu0
  %v409 = vadd.f32 %v341, %v408
  %v410 = vpop.f32.mrb[0].mxu0
  %411 = vmatprep.mubr.bf16.mxu0 0
  %412 = vmatmul.mubr.bf16.gmra.mrb[0].mxu0 %v263
  %v413 = vpop.f32.mrb[0].mxu0
  %v414 = vadd.f32 %v341, %v413
  %v415 = vpop.f32.mrb[0].mxu0
  %v416 = vpop.f32.mrb[0].mxu0
  %v417 = vadd.f32 %v341, %v416
  %v418 = vpop.f32.mrb[0].mxu0
  %419 = vdwg.mxu0
  %s420 = scalar_lea.vmem %s4, 32
  %v421 = vld [vmem:[%s420] sm:$0xf]
  %v422 = vld [vmem:[%s420 + $0x4] sm:$0xf]
  %v423 = vld [vmem:[%s420 + $0x8] sm:$0xf]
  %v424 = vld [vmem:[%s420 + $0xc] sm:$0xf]
  %s425 = scalar_lea.vmem %s6, 2
  %v426 = vld [vmem:[%s425] sm:$0x1]
  %v428 = vlaneseq
  %v429 = vshrl.u32 %v428, 7
  %v430 = vsub.s32 0, %v429
  %v431 = vrot.slane %v426, %v430
  %v437 = vunpack.c.l.b16 %v421
  %v438 = vunpack.c.l.b16 %v422
  %v439 = vunpack.c.l.b16 %v423
  %v440 = vunpack.c.l.b16 %v424
  %v441 = vpack.c.b16 %v438, %v437
  %v442 = vpack.c.b16 %v440, %v439
  %445 = vmatprep.subr.bf16.mxu0 0
  %446 = vmatpush1.bf16.msra.mxu0 %v441
  %447 = vmatprep.subr.bf16.mxu0 0
  %448 = vmatpush1.bf16.msra.mxu0 %v442
  %449 = vmatprep.subr.bf16.mxu0 0
  %450 = vmatpush1.bf16.msra.mxu0 0
  %451 = vmatprep.subr.bf16.mxu0 0
  %452 = vmatpush1.bf16.msra.mxu0 0
  %453 = vmatprep.subr.bf16.mxu0 0
  %454 = vmatpush1.bf16.msra.mxu0 0
  %455 = vmatprep.subr.bf16.mxu0 0
  %456 = vmatpush1.bf16.msra.mxu0 0
  %457 = vmatprep.subr.bf16.mxu0 0
  %458 = vmatpush1.bf16.msra.mxu0 0
  %459 = vmatprep.subr.bf16.mxu0 0
  %460 = vmatpush1.bf16.msra.mxu0 0
  %461 = vmatprep.subr.bf16.mxu0 0
  %462 = vmatpush1.bf16.msra.mxu0 0
  %463 = vmatprep.subr.bf16.mxu0 0
  %464 = vmatpush1.bf16.msra.mxu0 0
  %465 = vmatprep.subr.bf16.mxu0 0
  %466 = vmatpush1.bf16.msra.mxu0 0
  %467 = vmatprep.subr.bf16.mxu0 0
  %468 = vmatpush1.bf16.msra.mxu0 0
  %469 = vmatprep.subr.bf16.mxu0 0
  %470 = vmatpush1.bf16.msra.mxu0 0
  %471 = vmatprep.subr.bf16.mxu0 0
  %472 = vmatpush1.bf16.msra.mxu0 0
  %473 = vmatprep.subr.bf16.mxu0 0
  %474 = vmatpush1.bf16.msra.mxu0 0
  %475 = vmatprep.subr.bf16.mxu0 0
  %476 = vmatpush1.bf16.msra.mxu0 0
  %477 = vmatprep.mubr.bf16.mxu0 0
  %478 = vmatmul.mubr.bf16.gmra.mrb[0].mxu0 %v254
  %v479 = vpop.f32.mrb[0].mxu0
  %v480 = vadd.f32 %v431, %v479
  %v481 = vpop.f32.mrb[0].mxu0
  %v482 = vpop.f32.mrb[0].mxu0
  %v483 = vadd.f32 %v431, %v482
  %v484 = vpop.f32.mrb[0].mxu0
  %485 = vmatprep.mubr.bf16.mxu0 0
  %486 = vmatmul.mubr.bf16.gmra.mrb[0].mxu0 %v257
  %v487 = vpop.f32.mrb[0].mxu0
  %v488 = vadd.f32 %v431, %v487
  %v489 = vpop.f32.mrb[0].mxu0
  %v490 = vpop.f32.mrb[0].mxu0
  %v491 = vadd.f32 %v431, %v490
  %v492 = vpop.f32.mrb[0].mxu0
  %493 = vmatprep.mubr.bf16.mxu0 0
  %494 = vmatmul.mubr.bf16.gmra.mrb[0].mxu0 %v260
  %v495 = vpop.f32.mrb[0].mxu0
  %v496 = vadd.f32 %v431, %v495
  %v497 = vpop.f32.mrb[0].mxu0
  %v498 = vpop.f32.mrb[0].mxu0
  %v499 = vadd.f32 %v431, %v498
  %v500 = vpop.f32.mrb[0].mxu0
  %501 = vmatprep.mubr.bf16.mxu0 0
  %502 = vmatmul.mubr.bf16.gmra.mrb[0].mxu0 %v263
  %v503 = vpop.f32.mrb[0].mxu0
  %v504 = vadd.f32 %v431, %v503
  %v505 = vpop.f32.mrb[0].mxu0
  %v506 = vpop.f32.mrb[0].mxu0
  %v507 = vadd.f32 %v431, %v506
  %v508 = vpop.f32.mrb[0].mxu0
  %509 = vdwg.mxu0
  %v510 = vld [vmem:[%s5] sm:$0xf]
  %v511 = vld [vmem:[%s5 + $0x4] sm:$0xf]
  %v512 = vld [vmem:[%s5 + $0x8] sm:$0xf]
  %v513 = vld [vmem:[%s5 + $0xc] sm:$0xf]
  %s514 = scalar_lea.vmem %s5, 16
  %v515 = vld [vmem:[%s514] sm:$0xf]
  %v516 = vld [vmem:[%s514 + $0x4] sm:$0xf]
  %v517 = vld [vmem:[%s514 + $0x8] sm:$0xf]
  %v518 = vld [vmem:[%s514 + $0xc] sm:$0xf]
  %s519 = scalar_lea.vmem %s5, 32
  %v520 = vld [vmem:[%s519] sm:$0xf]
  %v521 = vld [vmem:[%s519 + $0x4] sm:$0xf]
  %v522 = vld [vmem:[%s519 + $0x8] sm:$0xf]
  %v523 = vld [vmem:[%s519 + $0xc] sm:$0xf]
  %v524 = vld [vmem:[%s7] sm:$0x1]
  %v529 = vunpack.c.l.b16 %v510
  %v530 = vunpack.c.l.b16 %v511
  %v531 = vunpack.c.l.b16 %v512
  %v532 = vunpack.c.l.b16 %v513
  %v533 = vpack.c.b16 %v530, %v529
  %v534 = vpack.c.b16 %v532, %v531
  %v538 = vsel %vm252, 0, 0
  %540 = vmatprep.subr.bf16.mxu0 0
  %541 = vmatpush1.bf16.msra.mxu0 %v533
  %542 = vmatprep.subr.bf16.mxu0 0
  %543 = vmatpush1.bf16.msra.mxu0 %v534
  %544 = vmatprep.subr.bf16.mxu0 0
  %545 = vmatpush1.bf16.msra.mxu0 0
  %546 = vmatprep.subr.bf16.mxu0 0
  %547 = vmatpush1.bf16.msra.mxu0 0
  %548 = vmatprep.subr.bf16.mxu0 0
  %549 = vmatpush1.bf16.msra.mxu0 0
  %550 = vmatprep.subr.bf16.mxu0 0
  %551 = vmatpush1.bf16.msra.mxu0 0
  %552 = vmatprep.subr.bf16.mxu0 0
  %553 = vmatpush1.bf16.msra.mxu0 0
  %554 = vmatprep.subr.bf16.mxu0 0
  %555 = vmatpush1.bf16.msra.mxu0 0
  %556 = vmatprep.subr.bf16.mxu0 0
  %557 = vmatpush1.bf16.msra.mxu0 0
  %558 = vmatprep.subr.bf16.mxu0 0
  %559 = vmatpush1.bf16.msra.mxu0 0
  %560 = vmatprep.subr.bf16.mxu0 0
  %561 = vmatpush1.bf16.msra.mxu0 0
  %562 = vmatprep.subr.bf16.mxu0 0
  %563 = vmatpush1.bf16.msra.mxu0 0
  %564 = vmatprep.subr.bf16.mxu0 0
  %565 = vmatpush1.bf16.msra.mxu0 0
  %566 = vmatprep.subr.bf16.mxu0 0
  %567 = vmatpush1.bf16.msra.mxu0 0
  %568 = vmatprep.subr.bf16.mxu0 0
  %569 = vmatpush1.bf16.msra.mxu0 0
  %570 = vmatprep.subr.bf16.mxu0 0
  %571 = vmatpush1.bf16.msra.mxu0 0
  %572 = vmatprep.mubr.bf16.mxu0 0
  %573 = vmatmul.mubr.bf16.gmra.mrb[0].mxu0 %v538
  %v574 = vpop.f32.mrb[0].mxu0
  %v575 = vadd.f32 0.0, %v574
  %v576 = vpop.f32.mrb[0].mxu0
  %v577 = vpop.f32.mrb[0].mxu0
  %v578 = vpop.f32.mrb[0].mxu0
  %579 = vdwg.mxu0
  %v584 = vunpack.c.l.b16 %v515
  %v585 = vunpack.c.l.b16 %v516
  %v586 = vunpack.c.l.b16 %v517
  %v587 = vunpack.c.l.b16 %v518
  %v588 = vpack.c.b16 %v585, %v584
  %v589 = vpack.c.b16 %v587, %v586
  %592 = vmatprep.subr.bf16.mxu0 0
  %593 = vmatpush1.bf16.msra.mxu0 %v588
  %594 = vmatprep.subr.bf16.mxu0 0
  %595 = vmatpush1.bf16.msra.mxu0 %v589
  %596 = vmatprep.subr.bf16.mxu0 0
  %597 = vmatpush1.bf16.msra.mxu0 0
  %598 = vmatprep.subr.bf16.mxu0 0
  %599 = vmatpush1.bf16.msra.mxu0 0
  %600 = vmatprep.subr.bf16.mxu0 0
  %601 = vmatpush1.bf16.msra.mxu0 0
  %602 = vmatprep.subr.bf16.mxu0 0
  %603 = vmatpush1.bf16.msra.mxu0 0
  %604 = vmatprep.subr.bf16.mxu0 0
  %605 = vmatpush1.bf16.msra.mxu0 0
  %606 = vmatprep.subr.bf16.mxu0 0
  %607 = vmatpush1.bf16.msra.mxu0 0
  %608 = vmatprep.subr.bf16.mxu0 0
  %609 = vmatpush1.bf16.msra.mxu0 0
  %610 = vmatprep.subr.bf16.mxu0 0
  %611 = vmatpush1.bf16.msra.mxu0 0
  %612 = vmatprep.subr.bf16.mxu0 0
  %613 = vmatpush1.bf16.msra.mxu0 0
  %614 = vmatprep.subr.bf16.mxu0 0
  %615 = vmatpush1.bf16.msra.mxu0 0
  %616 = vmatprep.subr.bf16.mxu0 0
  %617 = vmatpush1.bf16.msra.mxu0 0
  %618 = vmatprep.subr.bf16.mxu0 0
  %619 = vmatpush1.bf16.msra.mxu0 0
  %620 = vmatprep.subr.bf16.mxu0 0
  %621 = vmatpush1.bf16.msra.mxu0 0
  %622 = vmatprep.subr.bf16.mxu0 0
  %623 = vmatpush1.bf16.msra.mxu0 0
  %624 = vmatprep.mubr.bf16.mxu0 0
  %625 = vmatmul.mubr.bf16.gmra.mrb[0].mxu0 %v538
  %v626 = vpop.f32.mrb[0].mxu0
  %v627 = vadd.f32 0.0, %v626
  %v628 = vpop.f32.mrb[0].mxu0
  %v629 = vpop.f32.mrb[0].mxu0
  %v630 = vpop.f32.mrb[0].mxu0
  %631 = vdwg.mxu0
  %v632 = vadd.f32 %v300, %v575
  %v633 = vxor.u32 %v632, 2147483648
  %v634 = vmul.f32 %v633, 1.442695
  %v635 = vpow.pop %v634
  %v636 = vadd.f32 %v635, 1.0
  %v637 = vrcp.pop %v636
  %v638 = vmul.f32 1.0, %v637
  %v639 = vadd.f32 %v390, %v627
  %v640 = vxor.u32 %v639, 2147483648
  %v641 = vmul.f32 %v640, 1.442695
  %v642 = vpow.pop %v641
  %v643 = vadd.f32 %v642, 1.0
  %v644 = vrcp.pop %v643
  %v645 = vmul.f32 1.0, %v644
  %v647 = vlaneseq
  %v648 = vshrl.u32 %v647, 7
  %v649 = vsub.s32 0, %v648
  %v650 = vrot.slane %v524, %v649
  %v656 = vunpack.c.l.b16 %v520
  %v657 = vunpack.c.l.b16 %v521
  %v658 = vunpack.c.l.b16 %v522
  %v659 = vunpack.c.l.b16 %v523
  %v660 = vpack.c.b16 %v657, %v656
  %v661 = vpack.c.b16 %v659, %v658
  %664 = vmatprep.subr.bf16.mxu0 0
  %665 = vmatpush1.bf16.msra.mxu0 %v660
  %666 = vmatprep.subr.bf16.mxu0 0
  %667 = vmatpush1.bf16.msra.mxu0 %v661
  %668 = vmatprep.subr.bf16.mxu0 0
  %669 = vmatpush1.bf16.msra.mxu0 0
  %670 = vmatprep.subr.bf16.mxu0 0
  %671 = vmatpush1.bf16.msra.mxu0 0
  %672 = vmatprep.subr.bf16.mxu0 0
  %673 = vmatpush1.bf16.msra.mxu0 0
  %674 = vmatprep.subr.bf16.mxu0 0
  %675 = vmatpush1.bf16.msra.mxu0 0
  %676 = vmatprep.subr.bf16.mxu0 0
  %677 = vmatpush1.bf16.msra.mxu0 0
  %678 = vmatprep.subr.bf16.mxu0 0
  %679 = vmatpush1.bf16.msra.mxu0 0
  %680 = vmatprep.subr.bf16.mxu0 0
  %681 = vmatpush1.bf16.msra.mxu0 0
  %682 = vmatprep.subr.bf16.mxu0 0
  %683 = vmatpush1.bf16.msra.mxu0 0
  %684 = vmatprep.subr.bf16.mxu0 0
  %685 = vmatpush1.bf16.msra.mxu0 0
  %686 = vmatprep.subr.bf16.mxu0 0
  %687 = vmatpush1.bf16.msra.mxu0 0
  %688 = vmatprep.subr.bf16.mxu0 0
  %689 = vmatpush1.bf16.msra.mxu0 0
  %690 = vmatprep.subr.bf16.mxu0 0
  %691 = vmatpush1.bf16.msra.mxu0 0
  %692 = vmatprep.subr.bf16.mxu0 0
  %693 = vmatpush1.bf16.msra.mxu0 0
  %694 = vmatprep.subr.bf16.mxu0 0
  %695 = vmatpush1.bf16.msra.mxu0 0
  %696 = vmatprep.mubr.bf16.mxu0 0
  %697 = vmatmul.mubr.bf16.gmra.mrb[0].mxu0 %v538
  %v698 = vpop.f32.mrb[0].mxu0
  %v699 = vadd.f32 %v650, %v698
  %v700 = vpop.f32.mrb[0].mxu0
  %v701 = vpop.f32.mrb[0].mxu0
  %v702 = vpop.f32.mrb[0].mxu0
  %703 = vdwg.mxu0
  %v704 = vmul.f32 %v638, %v699
  %v705 = vadd.f32 %v480, %v704
  %v706 = vtanh.pop %v705
  %v707 = vsub.f32 1.0, %v645
  %v708 = vmul.f32 %v707, %v706
  %v709 = vmul.f32 %v645, 0.0
  %v710 = vadd.f32 %v708, %v709
  %711 = vst.msk [vmem:[%s11] sm:$0xff] %vm252, %v710
  %712 = vst.msk [vmem:[%s10] sm:$0xff] %vm252, %v217
  %v713 = vpack.c.bf16 %v710, %v710
  %v715 = vsel %vm252, %v713, 0
  %717 = vmatprep.subr.bf16.mxu0 0
  %718 = vmatpush1.bf16.msra.mxu0 %v533
  %719 = vmatprep.subr.bf16.mxu0 0
  %720 = vmatpush1.bf16.msra.mxu0 %v534
  %721 = vmatprep.subr.bf16.mxu0 0
  %722 = vmatpush1.bf16.msra.mxu0 0
  %723 = vmatprep.subr.bf16.mxu0 0
  %724 = vmatpush1.bf16.msra.mxu0 0
  %725 = vmatprep.subr.bf16.mxu0 0
  %726 = vmatpush1.bf16.msra.mxu0 0
  %727 = vmatprep.subr.bf16.mxu0 0
  %728 = vmatpush1.bf16.msra.mxu0 0
  %729 = vmatprep.subr.bf16.mxu0 0
  %730 = vmatpush1.bf16.msra.mxu0 0
  %731 = vmatprep.subr.bf16.mxu0 0
  %732 = vmatpush1.bf16.msra.mxu0 0
  %733 = vmatprep.subr.bf16.mxu0 0
  %734 = vmatpush1.bf16.msra.mxu0 0
  %735 = vmatprep.subr.bf16.mxu0 0
  %736 = vmatpush1.bf16.msra.mxu0 0
  %737 = vmatprep.subr.bf16.mxu0 0
  %738 = vmatpush1.bf16.msra.mxu0 0
  %739 = vmatprep.subr.bf16.mxu0 0
  %740 = vmatpush1.bf16.msra.mxu0 0
  %741 = vmatprep.subr.bf16.mxu0 0
  %742 = vmatpush1.bf16.msra.mxu0 0
  %743 = vmatprep.subr.bf16.mxu0 0
  %744 = vmatpush1.bf16.msra.mxu0 0
  %745 = vmatprep.subr.bf16.mxu0 0
  %746 = vmatpush1.bf16.msra.mxu0 0
  %747 = vmatprep.subr.bf16.mxu0 0
  %748 = vmatpush1.bf16.msra.mxu0 0
  %749 = vmatprep.mubr.bf16.mxu0 0
  %750 = vmatmul.mubr.bf16.gmra.mrb[0].mxu0 %v715
  %v751 = vpop.f32.mrb[0].mxu0
  %v752 = vadd.f32 0.0, %v751
  %v753 = vpop.f32.mrb[0].mxu0
  %v754 = vpop.f32.mrb[0].mxu0
  %v755 = vpop.f32.mrb[0].mxu0
  %756 = vdwg.mxu0
  %757 = vmatprep.subr.bf16.mxu0 0
  %758 = vmatpush1.bf16.msra.mxu0 %v588
  %759 = vmatprep.subr.bf16.mxu0 0
  %760 = vmatpush1.bf16.msra.mxu0 %v589
  %761 = vmatprep.subr.bf16.mxu0 0
  %762 = vmatpush1.bf16.msra.mxu0 0
  %763 = vmatprep.subr.bf16.mxu0 0
  %764 = vmatpush1.bf16.msra.mxu0 0
  %765 = vmatprep.subr.bf16.mxu0 0
  %766 = vmatpush1.bf16.msra.mxu0 0
  %767 = vmatprep.subr.bf16.mxu0 0
  %768 = vmatpush1.bf16.msra.mxu0 0
  %769 = vmatprep.subr.bf16.mxu0 0
  %770 = vmatpush1.bf16.msra.mxu0 0
  %771 = vmatprep.subr.bf16.mxu0 0
  %772 = vmatpush1.bf16.msra.mxu0 0
  %773 = vmatprep.subr.bf16.mxu0 0
  %774 = vmatpush1.bf16.msra.mxu0 0
  %775 = vmatprep.subr.bf16.mxu0 0
  %776 = vmatpush1.bf16.msra.mxu0 0
  %777 = vmatprep.subr.bf16.mxu0 0
  %778 = vmatpush1.bf16.msra.mxu0 0
  %779 = vmatprep.subr.bf16.mxu0 0
  %780 = vmatpush1.bf16.msra.mxu0 0
  %781 = vmatprep.subr.bf16.mxu0 0
  %782 = vmatpush1.bf16.msra.mxu0 0
  %783 = vmatprep.subr.bf16.mxu0 0
  %784 = vmatpush1.bf16.msra.mxu0 0
  %785 = vmatprep.subr.bf16.mxu0 0
  %786 = vmatpush1.bf16.msra.mxu0 0
  %787 = vmatprep.subr.bf16.mxu0 0
  %788 = vmatpush1.bf16.msra.mxu0 0
  %789 = vmatprep.mubr.bf16.mxu0 0
  %790 = vmatmul.mubr.bf16.gmra.mrb[0].mxu0 %v715
  %v791 = vpop.f32.mrb[0].mxu0
  %v792 = vadd.f32 0.0, %v791
  %v793 = vpop.f32.mrb[0].mxu0
  %v794 = vpop.f32.mrb[0].mxu0
  %v795 = vpop.f32.mrb[0].mxu0
  %796 = vdwg.mxu0
  %v797 = vadd.f32 %v303, %v752
  %v798 = vxor.u32 %v797, 2147483648
  %v799 = vmul.f32 %v798, 1.442695
  %v800 = vpow.pop %v799
  %v801 = vadd.f32 %v800, 1.0
  %v802 = vrcp.pop %v801
  %v803 = vmul.f32 1.0, %v802
  %v804 = vadd.f32 %v393, %v792
  %v805 = vxor.u32 %v804, 2147483648
  %v806 = vmul.f32 %v805, 1.442695
  %v807 = vpow.pop %v806
  %v808 = vadd.f32 %v807, 1.0
  %v809 = vrcp.pop %v808
  %v810 = vmul.f32 1.0, %v809
  %811 = vmatprep.subr.bf16.mxu0 0
  %812 = vmatpush1.bf16.msra.mxu0 %v660
  %813 = vmatprep.subr.bf16.mxu0 0
  %814 = vmatpush1.bf16.msra.mxu0 %v661
  %815 = vmatprep.subr.bf16.mxu0 0
  %816 = vmatpush1.bf16.msra.mxu0 0
  %817 = vmatprep.subr.bf16.mxu0 0
  %818 = vmatpush1.bf16.msra.mxu0 0
  %819 = vmatprep.subr.bf16.mxu0 0
  %820 = vmatpush1.bf16.msra.mxu0 0
  %821 = vmatprep.subr.bf16.mxu0 0
  %822 = vmatpush1.bf16.msra.mxu0 0
  %823 = vmatprep.subr.bf16.mxu0 0
  %824 = vmatpush1.bf16.msra.mxu0 0
  %825 = vmatprep.subr.bf16.mxu0 0
  %826 = vmatpush1.bf16.msra.mxu0 0
  %827 = vmatprep.subr.bf16.mxu0 0
  %828 = vmatpush1.bf16.msra.mxu0 0
  %829 = vmatprep.subr.bf16.mxu0 0
  %830 = vmatpush1.bf16.msra.mxu0 0
  %831 = vmatprep.subr.bf16.mxu0 0
  %832 = vmatpush1.bf16.msra.mxu0 0
  %833 = vmatprep.subr.bf16.mxu0 0
  %834 = vmatpush1.bf16.msra.mxu0 0
  %835 = vmatprep.subr.bf16.mxu0 0
  %836 = vmatpush1.bf16.msra.mxu0 0
  %837 = vmatprep.subr.bf16.mxu0 0
  %838 = vmatpush1.bf16.msra.mxu0 0
  %839 = vmatprep.subr.bf16.mxu0 0
  %840 = vmatpush1.bf16.msra.mxu0 0
  %841 = vmatprep.subr.bf16.mxu0 0
  %842 = vmatpush1.bf16.msra.mxu0 0
  %843 = vmatprep.mubr.bf16.mxu0 0
  %844 = vmatmul.mubr.bf16.gmra.mrb[0].mxu0 %v715
  %v845 = vpop.f32.mrb[0].mxu0
  %v846 = vadd.f32 %v650, %v845
  %v847 = vpop.f32.mrb[0].mxu0
  %v848 = vpop.f32.mrb[0].mxu0
  %v849 = vpop.f32.mrb[0].mxu0
  %850 = vdwg.mxu0
  %v851 = vmul.f32 %v803, %v846
  %v852 = vadd.f32 %v483, %v851
  %v853 = vtanh.pop %v852
  %v854 = vsub.f32 1.0, %v810
  %v855 = vmul.f32 %v854, %v853
  %v856 = vmul.f32 %v810, %v710
  %v857 = vadd.f32 %v855, %v856
  %859 = vrot.lane.b32.xlu0 %v857, 32
  %v860 = vpop.permute.xlu0 %859
  %vm862 = vcmask 523520
  %863 = vst.msk [vmem:[%s11] sm:$0xff] %vm862, %v860
  %865 = vrot.lane.b32.xlu0 %v218, 32
  %v866 = vpop.permute.xlu0 %865
  %868 = vst.msk [vmem:[%s10] sm:$0xff] %vm862, %v866
  %v869 = vpack.c.bf16 %v857, %v857
  %v871 = vsel %vm252, %v869, 0
  %873 = vmatprep.subr.bf16.mxu0 0
  %874 = vmatpush1.bf16.msra.mxu0 %v533
  %875 = vmatprep.subr.bf16.mxu0 0
  %876 = vmatpush1.bf16.msra.mxu0 %v534
  %877 = vmatprep.subr.bf16.mxu0 0
  %878 = vmatpush1.bf16.msra.mxu0 0
  %879 = vmatprep.subr.bf16.mxu0 0
  %880 = vmatpush1.bf16.msra.mxu0 0
  %881 = vmatprep.subr.bf16.mxu0 0
  %882 = vmatpush1.bf16.msra.mxu0 0
  %883 = vmatprep.subr.bf16.mxu0 0
  %884 = vmatpush1.bf16.msra.mxu0 0
  %885 = vmatprep.subr.bf16.mxu0 0
  %886 = vmatpush1.bf16.msra.mxu0 0
  %887 = vmatprep.subr.bf16.mxu0 0
  %888 = vmatpush1.bf16.msra.mxu0 0
  %889 = vmatprep.subr.bf16.mxu0 0
  %890 = vmatpush1.bf16.msra.mxu0 0
  %891 = vmatprep.subr.bf16.mxu0 0
  %892 = vmatpush1.bf16.msra.mxu0 0
  %893 = vmatprep.subr.bf16.mxu0 0
  %894 = vmatpush1.bf16.msra.mxu0 0
  %895 = vmatprep.subr.bf16.mxu0 0
  %896 = vmatpush1.bf16.msra.mxu0 0
  %897 = vmatprep.subr.bf16.mxu0 0
  %898 = vmatpush1.bf16.msra.mxu0 0
  %899 = vmatprep.subr.bf16.mxu0 0
  %900 = vmatpush1.bf16.msra.mxu0 0
  %901 = vmatprep.subr.bf16.mxu0 0
  %902 = vmatpush1.bf16.msra.mxu0 0
  %903 = vmatprep.subr.bf16.mxu0 0
  %904 = vmatpush1.bf16.msra.mxu0 0
  %905 = vmatprep.mubr.bf16.mxu0 0
  %906 = vmatmul.mubr.bf16.gmra.mrb[0].mxu0 %v871
  %v907 = vpop.f32.mrb[0].mxu0
  %v908 = vadd.f32 0.0, %v907
  %v909 = vpop.f32.mrb[0].mxu0
  %v910 = vpop.f32.mrb[0].mxu0
  %v911 = vpop.f32.mrb[0].mxu0
  %912 = vdwg.mxu0
  %913 = vmatprep.subr.bf16.mxu0 0
  %914 = vmatpush1.bf16.msra.mxu0 %v588
  %915 = vmatprep.subr.bf16.mxu0 0
  %916 = vmatpush1.bf16.msra.mxu0 %v589
  %917 = vmatprep.subr.bf16.mxu0 0
  %918 = vmatpush1.bf16.msra.mxu0 0
  %919 = vmatprep.subr.bf16.mxu0 0
  %920 = vmatpush1.bf16.msra.mxu0 0
  %921 = vmatprep.subr.bf16.mxu0 0
  %922 = vmatpush1.bf16.msra.mxu0 0
  %923 = vmatprep.subr.bf16.mxu0 0
  %924 = vmatpush1.bf16.msra.mxu0 0
  %925 = vmatprep.subr.bf16.mxu0 0
  %926 = vmatpush1.bf16.msra.mxu0 0
  %927 = vmatprep.subr.bf16.mxu0 0
  %928 = vmatpush1.bf16.msra.mxu0 0
  %929 = vmatprep.subr.bf16.mxu0 0
  %930 = vmatpush1.bf16.msra.mxu0 0
  %931 = vmatprep.subr.bf16.mxu0 0
  %932 = vmatpush1.bf16.msra.mxu0 0
  %933 = vmatprep.subr.bf16.mxu0 0
  %934 = vmatpush1.bf16.msra.mxu0 0
  %935 = vmatprep.subr.bf16.mxu0 0
  %936 = vmatpush1.bf16.msra.mxu0 0
  %937 = vmatprep.subr.bf16.mxu0 0
  %938 = vmatpush1.bf16.msra.mxu0 0
  %939 = vmatprep.subr.bf16.mxu0 0
  %940 = vmatpush1.bf16.msra.mxu0 0
  %941 = vmatprep.subr.bf16.mxu0 0
  %942 = vmatpush1.bf16.msra.mxu0 0
  %943 = vmatprep.subr.bf16.mxu0 0
  %944 = vmatpush1.bf16.msra.mxu0 0
  %945 = vmatprep.mubr.bf16.mxu0 0
  %946 = vmatmul.mubr.bf16.gmra.mrb[0].mxu0 %v871
  %v947 = vpop.f32.mrb[0].mxu0
  %v948 = vadd.f32 0.0, %v947
  %v949 = vpop.f32.mrb[0].mxu0
  %v950 = vpop.f32.mrb[0].mxu0
  %v951 = vpop.f32.mrb[0].mxu0
  %952 = vdwg.mxu0
  %v953 = vadd.f32 %v308, %v908
  %v954 = vxor.u32 %v953, 2147483648
  %v955 = vmul.f32 %v954, 1.442695
  %v956 = vpow.pop %v955
  %v957 = vadd.f32 %v956, 1.0
  %v958 = vrcp.pop %v957
  %v959 = vmul.f32 1.0, %v958
  %v960 = vadd.f32 %v398, %v948
  %v961 = vxor.u32 %v960, 2147483648
  %v962 = vmul.f32 %v961, 1.442695
  %v963 = vpow.pop %v962
  %v964 = vadd.f32 %v963, 1.0
  %v965 = vrcp.pop %v964
  %v966 = vmul.f32 1.0, %v965
  %967 = vmatprep.subr.bf16.mxu0 0
  %968 = vmatpush1.bf16.msra.mxu0 %v660
  %969 = vmatprep.subr.bf16.mxu0 0
  %970 = vmatpush1.bf16.msra.mxu0 %v661
  %971 = vmatprep.subr.bf16.mxu0 0
  %972 = vmatpush1.bf16.msra.mxu0 0
  %973 = vmatprep.subr.bf16.mxu0 0
  %974 = vmatpush1.bf16.msra.mxu0 0
  %975 = vmatprep.subr.bf16.mxu0 0
  %976 = vmatpush1.bf16.msra.mxu0 0
  %977 = vmatprep.subr.bf16.mxu0 0
  %978 = vmatpush1.bf16.msra.mxu0 0
  %979 = vmatprep.subr.bf16.mxu0 0
  %980 = vmatpush1.bf16.msra.mxu0 0
  %981 = vmatprep.subr.bf16.mxu0 0
  %982 = vmatpush1.bf16.msra.mxu0 0
  %983 = vmatprep.subr.bf16.mxu0 0
  %984 = vmatpush1.bf16.msra.mxu0 0
  %985 = vmatprep.subr.bf16.mxu0 0
  %986 = vmatpush1.bf16.msra.mxu0 0
  %987 = vmatprep.subr.bf16.mxu0 0
  %988 = vmatpush1.bf16.msra.mxu0 0
  %989 = vmatprep.subr.bf16.mxu0 0
  %990 = vmatpush1.bf16.msra.mxu0 0
  %991 = vmatprep.subr.bf16.mxu0 0
  %992 = vmatpush1.bf16.msra.mxu0 0
  %993 = vmatprep.subr.bf16.mxu0 0
  %994 = vmatpush1.bf16.msra.mxu0 0
  %995 = vmatprep.subr.bf16.mxu0 0
  %996 = vmatpush1.bf16.msra.mxu0 0
  %997 = vmatprep.subr.bf16.mxu0 0
  %998 = vmatpush1.bf16.msra.mxu0 0
  %999 = vmatprep.mubr.bf16.mxu0 0
  %1000 = vmatmul.mubr.bf16.gmra.mrb[0].mxu0 %v871
  %v1001 = vpop.f32.mrb[0].mxu0
  %v1002 = vadd.f32 %v650, %v1001
  %v1003 = vpop.f32.mrb[0].mxu0
  %v1004 = vpop.f32.mrb[0].mxu0
  %v1005 = vpop.f32.mrb[0].mxu0
  %1006 = vdwg.mxu0
  %v1007 = vmul.f32 %v959, %v1002
  %v1008 = vadd.f32 %v488, %v1007
  %v1009 = vtanh.pop %v1008
  %v1010 = vsub.f32 1.0, %v966
  %v1011 = vmul.f32 %v1010, %v1009
  %v1012 = vmul.f32 %v966, %v857
  %v1013 = vadd.f32 %v1011, %v1012
  %1015 = vrot.lane.b32.xlu0 %v1013, 64
  %v1016 = vpop.permute.xlu0 %1015
  %vm1018 = vcmask 785920
  %1019 = vst.msk [vmem:[%s11] sm:$0xff] %vm1018, %v1016
  %1021 = vrot.lane.b32.xlu0 %v219, 64
  %v1022 = vpop.permute.xlu0 %1021
  %1024 = vst.msk [vmem:[%s10] sm:$0xff] %vm1018, %v1022
  %v1025 = vpack.c.bf16 %v1013, %v1013
  %v1027 = vsel %vm252, %v1025, 0
  %1029 = vmatprep.subr.bf16.mxu0 0
  %1030 = vmatpush1.bf16.msra.mxu0 %v533
  %1031 = vmatprep.subr.bf16.mxu0 0
  %1032 = vmatpush1.bf16.msra.mxu0 %v534
  %1033 = vmatprep.subr.bf16.mxu0 0
  %1034 = vmatpush1.bf16.msra.mxu0 0
  %1035 = vmatprep.subr.bf16.mxu0 0
  %1036 = vmatpush1.bf16.msra.mxu0 0
  %1037 = vmatprep.subr.bf16.mxu0 0
  %1038 = vmatpush1.bf16.msra.mxu0 0
  %1039 = vmatprep.subr.bf16.mxu0 0
  %1040 = vmatpush1.bf16.msra.mxu0 0
  %1041 = vmatprep.subr.bf16.mxu0 0
  %1042 = vmatpush1.bf16.msra.mxu0 0
  %1043 = vmatprep.subr.bf16.mxu0 0
  %1044 = vmatpush1.bf16.msra.mxu0 0
  %1045 = vmatprep.subr.bf16.mxu0 0
  %1046 = vmatpush1.bf16.msra.mxu0 0
  %1047 = vmatprep.subr.bf16.mxu0 0
  %1048 = vmatpush1.bf16.msra.mxu0 0
  %1049 = vmatprep.subr.bf16.mxu0 0
  %1050 = vmatpush1.bf16.msra.mxu0 0
  %1051 = vmatprep.subr.bf16.mxu0 0
  %1052 = vmatpush1.bf16.msra.mxu0 0
  %1053 = vmatprep.subr.bf16.mxu0 0
  %1054 = vmatpush1.bf16.msra.mxu0 0
  %1055 = vmatprep.subr.bf16.mxu0 0
  %1056 = vmatpush1.bf16.msra.mxu0 0
  %1057 = vmatprep.subr.bf16.mxu0 0
  %1058 = vmatpush1.bf16.msra.mxu0 0
  %1059 = vmatprep.subr.bf16.mxu0 0
  %1060 = vmatpush1.bf16.msra.mxu0 0
  %1061 = vmatprep.mubr.bf16.mxu0 0
  %1062 = vmatmul.mubr.bf16.gmra.mrb[0].mxu0 %v1027
  %v1063 = vpop.f32.mrb[0].mxu0
  %v1064 = vadd.f32 0.0, %v1063
  %v1065 = vpop.f32.mrb[0].mxu0
  %v1066 = vpop.f32.mrb[0].mxu0
  %v1067 = vpop.f32.mrb[0].mxu0
  %1068 = vdwg.mxu0
  %1069 = vmatprep.subr.bf16.mxu0 0
  %1070 = vmatpush1.bf16.msra.mxu0 %v588
  %1071 = vmatprep.subr.bf16.mxu0 0
  %1072 = vmatpush1.bf16.msra.mxu0 %v589
  %1073 = vmatprep.subr.bf16.mxu0 0
  %1074 = vmatpush1.bf16.msra.mxu0 0
  %1075 = vmatprep.subr.bf16.mxu0 0
  %1076 = vmatpush1.bf16.msra.mxu0 0
  %1077 = vmatprep.subr.bf16.mxu0 0
  %1078 = vmatpush1.bf16.msra.mxu0 0
  %1079 = vmatprep.subr.bf16.mxu0 0
  %1080 = vmatpush1.bf16.msra.mxu0 0
  %1081 = vmatprep.subr.bf16.mxu0 0
  %1082 = vmatpush1.bf16.msra.mxu0 0
  %1083 = vmatprep.subr.bf16.mxu0 0
  %1084 = vmatpush1.bf16.msra.mxu0 0
  %1085 = vmatprep.subr.bf16.mxu0 0
  %1086 = vmatpush1.bf16.msra.mxu0 0
  %1087 = vmatprep.subr.bf16.mxu0 0
  %1088 = vmatpush1.bf16.msra.mxu0 0
  %1089 = vmatprep.subr.bf16.mxu0 0
  %1090 = vmatpush1.bf16.msra.mxu0 0
  %1091 = vmatprep.subr.bf16.mxu0 0
  %1092 = vmatpush1.bf16.msra.mxu0 0
  %1093 = vmatprep.subr.bf16.mxu0 0
  %1094 = vmatpush1.bf16.msra.mxu0 0
  %1095 = vmatprep.subr.bf16.mxu0 0
  %1096 = vmatpush1.bf16.msra.mxu0 0
  %1097 = vmatprep.subr.bf16.mxu0 0
  %1098 = vmatpush1.bf16.msra.mxu0 0
  %1099 = vmatprep.subr.bf16.mxu0 0
  %1100 = vmatpush1.bf16.msra.mxu0 0
  %1101 = vmatprep.mubr.bf16.mxu0 0
  %1102 = vmatmul.mubr.bf16.gmra.mrb[0].mxu0 %v1027
  %v1103 = vpop.f32.mrb[0].mxu0
  %v1104 = vadd.f32 0.0, %v1103
  %v1105 = vpop.f32.mrb[0].mxu0
  %v1106 = vpop.f32.mrb[0].mxu0
  %v1107 = vpop.f32.mrb[0].mxu0
  %1108 = vdwg.mxu0
  %v1109 = vadd.f32 %v311, %v1064
  %v1110 = vxor.u32 %v1109, 2147483648
  %v1111 = vmul.f32 %v1110, 1.442695
  %v1112 = vpow.pop %v1111
  %v1113 = vadd.f32 %v1112, 1.0
  %v1114 = vrcp.pop %v1113
  %v1115 = vmul.f32 1.0, %v1114
  %v1116 = vadd.f32 %v401, %v1104
  %v1117 = vxor.u32 %v1116, 2147483648
  %v1118 = vmul.f32 %v1117, 1.442695
  %v1119 = vpow.pop %v1118
  %v1120 = vadd.f32 %v1119, 1.0
  %v1121 = vrcp.pop %v1120
  %v1122 = vmul.f32 1.0, %v1121
  %1123 = vmatprep.subr.bf16.mxu0 0
  %1124 = vmatpush1.bf16.msra.mxu0 %v660
  %1125 = vmatprep.subr.bf16.mxu0 0
  %1126 = vmatpush1.bf16.msra.mxu0 %v661
  %1127 = vmatprep.subr.bf16.mxu0 0
  %1128 = vmatpush1.bf16.msra.mxu0 0
  %1129 = vmatprep.subr.bf16.mxu0 0
  %1130 = vmatpush1.bf16.msra.mxu0 0
  %1131 = vmatprep.subr.bf16.mxu0 0
  %1132 = vmatpush1.bf16.msra.mxu0 0
  %1133 = vmatprep.subr.bf16.mxu0 0
  %1134 = vmatpush1.bf16.msra.mxu0 0
  %1135 = vmatprep.subr.bf16.mxu0 0
  %1136 = vmatpush1.bf16.msra.mxu0 0
  %1137 = vmatprep.subr.bf16.mxu0 0
  %1138 = vmatpush1.bf16.msra.mxu0 0
  %1139 = vmatprep.subr.bf16.mxu0 0
  %1140 = vmatpush1.bf16.msra.mxu0 0
  %1141 = vmatprep.subr.bf16.mxu0 0
  %1142 = vmatpush1.bf16.msra.mxu0 0
  %1143 = vmatprep.subr.bf16.mxu0 0
  %1144 = vmatpush1.bf16.msra.mxu0 0
  %1145 = vmatprep.subr.bf16.mxu0 0
  %1146 = vmatpush1.bf16.msra.mxu0 0
  %1147 = vmatprep.subr.bf16.mxu0 0
  %1148 = vmatpush1.bf16.msra.mxu0 0
  %1149 = vmatprep.subr.bf16.mxu0 0
  %1150 = vmatpush1.bf16.msra.mxu0 0
  %1151 = vmatprep.subr.bf16.mxu0 0
  %1152 = vmatpush1.bf16.msra.mxu0 0
  %1153 = vmatprep.subr.bf16.mxu0 0
  %1154 = vmatpush1.bf16.msra.mxu0 0
  %1155 = vmatprep.mubr.bf16.mxu0 0
  %1156 = vmatmul.mubr.bf16.gmra.mrb[0].mxu0 %v1027
  %v1157 = vpop.f32.mrb[0].mxu0
  %v1158 = vadd.f32 %v650, %v1157
  %v1159 = vpop.f32.mrb[0].mxu0
  %v1160 = vpop.f32.mrb[0].mxu0
  %v1161 = vpop.f32.mrb[0].mxu0
  %1162 = vdwg.mxu0
  %v1163 = vmul.f32 %v1115, %v1158
  %v1164 = vadd.f32 %v491, %v1163
  %v1165 = vtanh.pop %v1164
  %v1166 = vsub.f32 1.0, %v1122
  %v1167 = vmul.f32 %v1166, %v1165
  %v1168 = vmul.f32 %v1122, %v1013
  %v1169 = vadd.f32 %v1167, %v1168
  %1171 = vrot.lane.b32.xlu0 %v1169, 96
  %v1172 = vpop.permute.xlu0 %1171
  %vm1174 = vcmask 1048320
  %1175 = vst.msk [vmem:[%s11] sm:$0xff] %vm1174, %v1172
  %1177 = vrot.lane.b32.xlu0 %v220, 96
  %v1178 = vpop.permute.xlu0 %1177
  %1180 = vst.msk [vmem:[%s10] sm:$0xff] %vm1174, %v1178
  %v1181 = vpack.c.bf16 %v1169, %v1169
  %v1183 = vsel %vm252, %v1181, 0
  %1185 = vmatprep.subr.bf16.mxu0 0
  %1186 = vmatpush1.bf16.msra.mxu0 %v533
  %1187 = vmatprep.subr.bf16.mxu0 0
  %1188 = vmatpush1.bf16.msra.mxu0 %v534
  %1189 = vmatprep.subr.bf16.mxu0 0
  %1190 = vmatpush1.bf16.msra.mxu0 0
  %1191 = vmatprep.subr.bf16.mxu0 0
  %1192 = vmatpush1.bf16.msra.mxu0 0
  %1193 = vmatprep.subr.bf16.mxu0 0
  %1194 = vmatpush1.bf16.msra.mxu0 0
  %1195 = vmatprep.subr.bf16.mxu0 0
  %1196 = vmatpush1.bf16.msra.mxu0 0
  %1197 = vmatprep.subr.bf16.mxu0 0
  %1198 = vmatpush1.bf16.msra.mxu0 0
  %1199 = vmatprep.subr.bf16.mxu0 0
  %1200 = vmatpush1.bf16.msra.mxu0 0
  %1201 = vmatprep.subr.bf16.mxu0 0
  %1202 = vmatpush1.bf16.msra.mxu0 0
  %1203 = vmatprep.subr.bf16.mxu0 0
  %1204 = vmatpush1.bf16.msra.mxu0 0
  %1205 = vmatprep.subr.bf16.mxu0 0
  %1206 = vmatpush1.bf16.msra.mxu0 0
  %1207 = vmatprep.subr.bf16.mxu0 0
  %1208 = vmatpush1.bf16.msra.mxu0 0
  %1209 = vmatprep.subr.bf16.mxu0 0
  %1210 = vmatpush1.bf16.msra.mxu0 0
  %1211 = vmatprep.subr.bf16.mxu0 0
  %1212 = vmatpush1.bf16.msra.mxu0 0
  %1213 = vmatprep.subr.bf16.mxu0 0
  %1214 = vmatpush1.bf16.msra.mxu0 0
  %1215 = vmatprep.subr.bf16.mxu0 0
  %1216 = vmatpush1.bf16.msra.mxu0 0
  %1217 = vmatprep.mubr.bf16.mxu0 0
  %1218 = vmatmul.mubr.bf16.gmra.mrb[0].mxu0 %v1183
  %v1219 = vpop.f32.mrb[0].mxu0
  %v1220 = vadd.f32 0.0, %v1219
  %v1221 = vpop.f32.mrb[0].mxu0
  %v1222 = vpop.f32.mrb[0].mxu0
  %v1223 = vpop.f32.mrb[0].mxu0
  %1224 = vdwg.mxu0
  %1225 = vmatprep.subr.bf16.mxu0 0
  %1226 = vmatpush1.bf16.msra.mxu0 %v588
  %1227 = vmatprep.subr.bf16.mxu0 0
  %1228 = vmatpush1.bf16.msra.mxu0 %v589
  %1229 = vmatprep.subr.bf16.mxu0 0
  %1230 = vmatpush1.bf16.msra.mxu0 0
  %1231 = vmatprep.subr.bf16.mxu0 0
  %1232 = vmatpush1.bf16.msra.mxu0 0
  %1233 = vmatprep.subr.bf16.mxu0 0
  %1234 = vmatpush1.bf16.msra.mxu0 0
  %1235 = vmatprep.subr.bf16.mxu0 0
  %1236 = vmatpush1.bf16.msra.mxu0 0
  %1237 = vmatprep.subr.bf16.mxu0 0
  %1238 = vmatpush1.bf16.msra.mxu0 0
  %1239 = vmatprep.subr.bf16.mxu0 0
  %1240 = vmatpush1.bf16.msra.mxu0 0
  %1241 = vmatprep.subr.bf16.mxu0 0
  %1242 = vmatpush1.bf16.msra.mxu0 0
  %1243 = vmatprep.subr.bf16.mxu0 0
  %1244 = vmatpush1.bf16.msra.mxu0 0
  %1245 = vmatprep.subr.bf16.mxu0 0
  %1246 = vmatpush1.bf16.msra.mxu0 0
  %1247 = vmatprep.subr.bf16.mxu0 0
  %1248 = vmatpush1.bf16.msra.mxu0 0
  %1249 = vmatprep.subr.bf16.mxu0 0
  %1250 = vmatpush1.bf16.msra.mxu0 0
  %1251 = vmatprep.subr.bf16.mxu0 0
  %1252 = vmatpush1.bf16.msra.mxu0 0
  %1253 = vmatprep.subr.bf16.mxu0 0
  %1254 = vmatpush1.bf16.msra.mxu0 0
  %1255 = vmatprep.subr.bf16.mxu0 0
  %1256 = vmatpush1.bf16.msra.mxu0 0
  %1257 = vmatprep.mubr.bf16.mxu0 0
  %1258 = vmatmul.mubr.bf16.gmra.mrb[0].mxu0 %v1183
  %v1259 = vpop.f32.mrb[0].mxu0
  %v1260 = vadd.f32 0.0, %v1259
  %v1261 = vpop.f32.mrb[0].mxu0
  %v1262 = vpop.f32.mrb[0].mxu0
  %v1263 = vpop.f32.mrb[0].mxu0
  %1264 = vdwg.mxu0
  %v1265 = vadd.f32 %v316, %v1220
  %v1266 = vxor.u32 %v1265, 2147483648
  %v1267 = vmul.f32 %v1266, 1.442695
  %v1268 = vpow.pop %v1267
  %v1269 = vadd.f32 %v1268, 1.0
  %v1270 = vrcp.pop %v1269
  %v1271 = vmul.f32 1.0, %v1270
  %v1272 = vadd.f32 %v406, %v1260
  %v1273 = vxor.u32 %v1272, 2147483648
  %v1274 = vmul.f32 %v1273, 1.442695
  %v1275 = vpow.pop %v1274
  %v1276 = vadd.f32 %v1275, 1.0
  %v1277 = vrcp.pop %v1276
  %v1278 = vmul.f32 1.0, %v1277
  %1279 = vmatprep.subr.bf16.mxu0 0
  %1280 = vmatpush1.bf16.msra.mxu0 %v660
  %1281 = vmatprep.subr.bf16.mxu0 0
  %1282 = vmatpush1.bf16.msra.mxu0 %v661
  %1283 = vmatprep.subr.bf16.mxu0 0
  %1284 = vmatpush1.bf16.msra.mxu0 0
  %1285 = vmatprep.subr.bf16.mxu0 0
  %1286 = vmatpush1.bf16.msra.mxu0 0
  %1287 = vmatprep.subr.bf16.mxu0 0
  %1288 = vmatpush1.bf16.msra.mxu0 0
  %1289 = vmatprep.subr.bf16.mxu0 0
  %1290 = vmatpush1.bf16.msra.mxu0 0
  %1291 = vmatprep.subr.bf16.mxu0 0
  %1292 = vmatpush1.bf16.msra.mxu0 0
  %1293 = vmatprep.subr.bf16.mxu0 0
  %1294 = vmatpush1.bf16.msra.mxu0 0
  %1295 = vmatprep.subr.bf16.mxu0 0
  %1296 = vmatpush1.bf16.msra.mxu0 0
  %1297 = vmatprep.subr.bf16.mxu0 0
  %1298 = vmatpush1.bf16.msra.mxu0 0
  %1299 = vmatprep.subr.bf16.mxu0 0
  %1300 = vmatpush1.bf16.msra.mxu0 0
  %1301 = vmatprep.subr.bf16.mxu0 0
  %1302 = vmatpush1.bf16.msra.mxu0 0
  %1303 = vmatprep.subr.bf16.mxu0 0
  %1304 = vmatpush1.bf16.msra.mxu0 0
  %1305 = vmatprep.subr.bf16.mxu0 0
  %1306 = vmatpush1.bf16.msra.mxu0 0
  %1307 = vmatprep.subr.bf16.mxu0 0
  %1308 = vmatpush1.bf16.msra.mxu0 0
  %1309 = vmatprep.subr.bf16.mxu0 0
  %1310 = vmatpush1.bf16.msra.mxu0 0
  %1311 = vmatprep.mubr.bf16.mxu0 0
  %1312 = vmatmul.mubr.bf16.gmra.mrb[0].mxu0 %v1183
  %v1313 = vpop.f32.mrb[0].mxu0
  %v1314 = vadd.f32 %v650, %v1313
  %v1315 = vpop.f32.mrb[0].mxu0
  %v1316 = vpop.f32.mrb[0].mxu0
  %v1317 = vpop.f32.mrb[0].mxu0
  %1318 = vdwg.mxu0
  %v1319 = vmul.f32 %v1271, %v1314
  %v1320 = vadd.f32 %v496, %v1319
  %v1321 = vtanh.pop %v1320
  %v1322 = vsub.f32 1.0, %v1278
  %v1323 = vmul.f32 %v1322, %v1321
  %v1324 = vmul.f32 %v1278, %v1169
  %v1325 = vadd.f32 %v1323, %v1324
  %1326 = vst.msk [vmem:[%s11 + $0x8] sm:$0xff] %vm252, %v1325
  %1327 = vst.msk [vmem:[%s10 + $0x8] sm:$0xff] %vm252, %v221
  %v1328 = vpack.c.bf16 %v1325, %v1325
  %v1330 = vsel %vm252, %v1328, 0
  %1332 = vmatprep.subr.bf16.mxu0 0
  %1333 = vmatpush1.bf16.msra.mxu0 %v533
  %1334 = vmatprep.subr.bf16.mxu0 0
  %1335 = vmatpush1.bf16.msra.mxu0 %v534
  %1336 = vmatprep.subr.bf16.mxu0 0
  %1337 = vmatpush1.bf16.msra.mxu0 0
  %1338 = vmatprep.subr.bf16.mxu0 0
  %1339 = vmatpush1.bf16.msra.mxu0 0
  %1340 = vmatprep.subr.bf16.mxu0 0
  %1341 = vmatpush1.bf16.msra.mxu0 0
  %1342 = vmatprep.subr.bf16.mxu0 0
  %1343 = vmatpush1.bf16.msra.mxu0 0
  %1344 = vmatprep.subr.bf16.mxu0 0
  %1345 = vmatpush1.bf16.msra.mxu0 0
  %1346 = vmatprep.subr.bf16.mxu0 0
  %1347 = vmatpush1.bf16.msra.mxu0 0
  %1348 = vmatprep.subr.bf16.mxu0 0
  %1349 = vmatpush1.bf16.msra.mxu0 0
  %1350 = vmatprep.subr.bf16.mxu0 0
  %1351 = vmatpush1.bf16.msra.mxu0 0
  %1352 = vmatprep.subr.bf16.mxu0 0
  %1353 = vmatpush1.bf16.msra.mxu0 0
  %1354 = vmatprep.subr.bf16.mxu0 0
  %1355 = vmatpush1.bf16.msra.mxu0 0
  %1356 = vmatprep.subr.bf16.mxu0 0
  %1357 = vmatpush1.bf16.msra.mxu0 0
  %1358 = vmatprep.subr.bf16.mxu0 0
  %1359 = vmatpush1.bf16.msra.mxu0 0
  %1360 = vmatprep.subr.bf16.mxu0 0
  %1361 = vmatpush1.bf16.msra.mxu0 0
  %1362 = vmatprep.subr.bf16.mxu0 0
  %1363 = vmatpush1.bf16.msra.mxu0 0
  %1364 = vmatprep.mubr.bf16.mxu0 0
  %1365 = vmatmul.mubr.bf16.gmra.mrb[0].mxu0 %v1330
  %v1366 = vpop.f32.mrb[0].mxu0
  %v1367 = vadd.f32 0.0, %v1366
  %v1368 = vpop.f32.mrb[0].mxu0
  %v1369 = vpop.f32.mrb[0].mxu0
  %v1370 = vpop.f32.mrb[0].mxu0
  %1371 = vdwg.mxu0
  %1372 = vmatprep.subr.bf16.mxu0 0
  %1373 = vmatpush1.bf16.msra.mxu0 %v588
  %1374 = vmatprep.subr.bf16.mxu0 0
  %1375 = vmatpush1.bf16.msra.mxu0 %v589
  %1376 = vmatprep.subr.bf16.mxu0 0
  %1377 = vmatpush1.bf16.msra.mxu0 0
  %1378 = vmatprep.subr.bf16.mxu0 0
  %1379 = vmatpush1.bf16.msra.mxu0 0
  %1380 = vmatprep.subr.bf16.mxu0 0
  %1381 = vmatpush1.bf16.msra.mxu0 0
  %1382 = vmatprep.subr.bf16.mxu0 0
  %1383 = vmatpush1.bf16.msra.mxu0 0
  %1384 = vmatprep.subr.bf16.mxu0 0
  %1385 = vmatpush1.bf16.msra.mxu0 0
  %1386 = vmatprep.subr.bf16.mxu0 0
  %1387 = vmatpush1.bf16.msra.mxu0 0
  %1388 = vmatprep.subr.bf16.mxu0 0
  %1389 = vmatpush1.bf16.msra.mxu0 0
  %1390 = vmatprep.subr.bf16.mxu0 0
  %1391 = vmatpush1.bf16.msra.mxu0 0
  %1392 = vmatprep.subr.bf16.mxu0 0
  %1393 = vmatpush1.bf16.msra.mxu0 0
  %1394 = vmatprep.subr.bf16.mxu0 0
  %1395 = vmatpush1.bf16.msra.mxu0 0
  %1396 = vmatprep.subr.bf16.mxu0 0
  %1397 = vmatpush1.bf16.msra.mxu0 0
  %1398 = vmatprep.subr.bf16.mxu0 0
  %1399 = vmatpush1.bf16.msra.mxu0 0
  %1400 = vmatprep.subr.bf16.mxu0 0
  %1401 = vmatpush1.bf16.msra.mxu0 0
  %1402 = vmatprep.subr.bf16.mxu0 0
  %1403 = vmatpush1.bf16.msra.mxu0 0
  %1404 = vmatprep.mubr.bf16.mxu0 0
  %1405 = vmatmul.mubr.bf16.gmra.mrb[0].mxu0 %v1330
  %v1406 = vpop.f32.mrb[0].mxu0
  %v1407 = vadd.f32 0.0, %v1406
  %v1408 = vpop.f32.mrb[0].mxu0
  %v1409 = vpop.f32.mrb[0].mxu0
  %v1410 = vpop.f32.mrb[0].mxu0
  %1411 = vdwg.mxu0
  %v1412 = vadd.f32 %v319, %v1367
  %v1413 = vxor.u32 %v1412, 2147483648
  %v1414 = vmul.f32 %v1413, 1.442695
  %v1415 = vpow.pop %v1414
  %v1416 = vadd.f32 %v1415, 1.0
  %v1417 = vrcp.pop %v1416
  %v1418 = vmul.f32 1.0, %v1417
  %v1419 = vadd.f32 %v409, %v1407
  %v1420 = vxor.u32 %v1419, 2147483648
  %v1421 = vmul.f32 %v1420, 1.442695
  %v1422 = vpow.pop %v1421
  %v1423 = vadd.f32 %v1422, 1.0
  %v1424 = vrcp.pop %v1423
  %v1425 = vmul.f32 1.0, %v1424
  %1426 = vmatprep.subr.bf16.mxu0 0
  %1427 = vmatpush1.bf16.msra.mxu0 %v660
  %1428 = vmatprep.subr.bf16.mxu0 0
  %1429 = vmatpush1.bf16.msra.mxu0 %v661
  %1430 = vmatprep.subr.bf16.mxu0 0
  %1431 = vmatpush1.bf16.msra.mxu0 0
  %1432 = vmatprep.subr.bf16.mxu0 0
  %1433 = vmatpush1.bf16.msra.mxu0 0
  %1434 = vmatprep.subr.bf16.mxu0 0
  %1435 = vmatpush1.bf16.msra.mxu0 0
  %1436 = vmatprep.subr.bf16.mxu0 0
  %1437 = vmatpush1.bf16.msra.mxu0 0
  %1438 = vmatprep.subr.bf16.mxu0 0
  %1439 = vmatpush1.bf16.msra.mxu0 0
  %1440 = vmatprep.subr.bf16.mxu0 0
  %1441 = vmatpush1.bf16.msra.mxu0 0
  %1442 = vmatprep.subr.bf16.mxu0 0
  %1443 = vmatpush1.bf16.msra.mxu0 0
  %1444 = vmatprep.subr.bf16.mxu0 0
  %1445 = vmatpush1.bf16.msra.mxu0 0
  %1446 = vmatprep.subr.bf16.mxu0 0
  %1447 = vmatpush1.bf16.msra.mxu0 0
  %1448 = vmatprep.subr.bf16.mxu0 0
  %1449 = vmatpush1.bf16.msra.mxu0 0
  %1450 = vmatprep.subr.bf16.mxu0 0
  %1451 = vmatpush1.bf16.msra.mxu0 0
  %1452 = vmatprep.subr.bf16.mxu0 0
  %1453 = vmatpush1.bf16.msra.mxu0 0
  %1454 = vmatprep.subr.bf16.mxu0 0
  %1455 = vmatpush1.bf16.msra.mxu0 0
  %1456 = vmatprep.subr.bf16.mxu0 0
  %1457 = vmatpush1.bf16.msra.mxu0 0
  %1458 = vmatprep.mubr.bf16.mxu0 0
  %1459 = vmatmul.mubr.bf16.gmra.mrb[0].mxu0 %v1330
  %v1460 = vpop.f32.mrb[0].mxu0
  %v1461 = vadd.f32 %v650, %v1460
  %v1462 = vpop.f32.mrb[0].mxu0
  %v1463 = vpop.f32.mrb[0].mxu0
  %v1464 = vpop.f32.mrb[0].mxu0
  %1465 = vdwg.mxu0
  %v1466 = vmul.f32 %v1418, %v1461
  %v1467 = vadd.f32 %v499, %v1466
  %v1468 = vtanh.pop %v1467
  %v1469 = vsub.f32 1.0, %v1425
  %v1470 = vmul.f32 %v1469, %v1468
  %v1471 = vmul.f32 %v1425, %v1325
  %v1472 = vadd.f32 %v1470, %v1471
  %1474 = vrot.lane.b32.xlu0 %v1472, 32
  %v1475 = vpop.permute.xlu0 %1474
  %1477 = vst.msk [vmem:[%s11 + $0x8] sm:$0xff] %vm862, %v1475
  %1479 = vrot.lane.b32.xlu0 %v222, 32
  %v1480 = vpop.permute.xlu0 %1479
  %1482 = vst.msk [vmem:[%s10 + $0x8] sm:$0xff] %vm862, %v1480
  %v1483 = vpack.c.bf16 %v1472, %v1472
  %v1485 = vsel %vm252, %v1483, 0
  %1487 = vmatprep.subr.bf16.mxu0 0
  %1488 = vmatpush1.bf16.msra.mxu0 %v533
  %1489 = vmatprep.subr.bf16.mxu0 0
  %1490 = vmatpush1.bf16.msra.mxu0 %v534
  %1491 = vmatprep.subr.bf16.mxu0 0
  %1492 = vmatpush1.bf16.msra.mxu0 0
  %1493 = vmatprep.subr.bf16.mxu0 0
  %1494 = vmatpush1.bf16.msra.mxu0 0
  %1495 = vmatprep.subr.bf16.mxu0 0
  %1496 = vmatpush1.bf16.msra.mxu0 0
  %1497 = vmatprep.subr.bf16.mxu0 0
  %1498 = vmatpush1.bf16.msra.mxu0 0
  %1499 = vmatprep.subr.bf16.mxu0 0
  %1500 = vmatpush1.bf16.msra.mxu0 0
  %1501 = vmatprep.subr.bf16.mxu0 0
  %1502 = vmatpush1.bf16.msra.mxu0 0
  %1503 = vmatprep.subr.bf16.mxu0 0
  %1504 = vmatpush1.bf16.msra.mxu0 0
  %1505 = vmatprep.subr.bf16.mxu0 0
  %1506 = vmatpush1.bf16.msra.mxu0 0
  %1507 = vmatprep.subr.bf16.mxu0 0
  %1508 = vmatpush1.bf16.msra.mxu0 0
  %1509 = vmatprep.subr.bf16.mxu0 0
  %1510 = vmatpush1.bf16.msra.mxu0 0
  %1511 = vmatprep.subr.bf16.mxu0 0
  %1512 = vmatpush1.bf16.msra.mxu0 0
  %1513 = vmatprep.subr.bf16.mxu0 0
  %1514 = vmatpush1.bf16.msra.mxu0 0
  %1515 = vmatprep.subr.bf16.mxu0 0
  %1516 = vmatpush1.bf16.msra.mxu0 0
  %1517 = vmatprep.subr.bf16.mxu0 0
  %1518 = vmatpush1.bf16.msra.mxu0 0
  %1519 = vmatprep.mubr.bf16.mxu0 0
  %1520 = vmatmul.mubr.bf16.gmra.mrb[0].mxu0 %v1485
  %v1521 = vpop.f32.mrb[0].mxu0
  %v1522 = vadd.f32 0.0, %v1521
  %v1523 = vpop.f32.mrb[0].mxu0
  %v1524 = vpop.f32.mrb[0].mxu0
  %v1525 = vpop.f32.mrb[0].mxu0
  %1526 = vdwg.mxu0
  %1527 = vmatprep.subr.bf16.mxu0 0
  %1528 = vmatpush1.bf16.msra.mxu0 %v588
  %1529 = vmatprep.subr.bf16.mxu0 0
  %1530 = vmatpush1.bf16.msra.mxu0 %v589
  %1531 = vmatprep.subr.bf16.mxu0 0
  %1532 = vmatpush1.bf16.msra.mxu0 0
  %1533 = vmatprep.subr.bf16.mxu0 0
  %1534 = vmatpush1.bf16.msra.mxu0 0
  %1535 = vmatprep.subr.bf16.mxu0 0
  %1536 = vmatpush1.bf16.msra.mxu0 0
  %1537 = vmatprep.subr.bf16.mxu0 0
  %1538 = vmatpush1.bf16.msra.mxu0 0
  %1539 = vmatprep.subr.bf16.mxu0 0
  %1540 = vmatpush1.bf16.msra.mxu0 0
  %1541 = vmatprep.subr.bf16.mxu0 0
  %1542 = vmatpush1.bf16.msra.mxu0 0
  %1543 = vmatprep.subr.bf16.mxu0 0
  %1544 = vmatpush1.bf16.msra.mxu0 0
  %1545 = vmatprep.subr.bf16.mxu0 0
  %1546 = vmatpush1.bf16.msra.mxu0 0
  %1547 = vmatprep.subr.bf16.mxu0 0
  %1548 = vmatpush1.bf16.msra.mxu0 0
  %1549 = vmatprep.subr.bf16.mxu0 0
  %1550 = vmatpush1.bf16.msra.mxu0 0
  %1551 = vmatprep.subr.bf16.mxu0 0
  %1552 = vmatpush1.bf16.msra.mxu0 0
  %1553 = vmatprep.subr.bf16.mxu0 0
  %1554 = vmatpush1.bf16.msra.mxu0 0
  %1555 = vmatprep.subr.bf16.mxu0 0
  %1556 = vmatpush1.bf16.msra.mxu0 0
  %1557 = vmatprep.subr.bf16.mxu0 0
  %1558 = vmatpush1.bf16.msra.mxu0 0
  %1559 = vmatprep.mubr.bf16.mxu0 0
  %1560 = vmatmul.mubr.bf16.gmra.mrb[0].mxu0 %v1485
  %v1561 = vpop.f32.mrb[0].mxu0
  %v1562 = vadd.f32 0.0, %v1561
  %v1563 = vpop.f32.mrb[0].mxu0
  %v1564 = vpop.f32.mrb[0].mxu0
  %v1565 = vpop.f32.mrb[0].mxu0
  %1566 = vdwg.mxu0
  %v1567 = vadd.f32 %v324, %v1522
  %v1568 = vxor.u32 %v1567, 2147483648
  %v1569 = vmul.f32 %v1568, 1.442695
  %v1570 = vpow.pop %v1569
  %v1571 = vadd.f32 %v1570, 1.0
  %v1572 = vrcp.pop %v1571
  %v1573 = vmul.f32 1.0, %v1572
  %v1574 = vadd.f32 %v414, %v1562
  %v1575 = vxor.u32 %v1574, 2147483648
  %v1576 = vmul.f32 %v1575, 1.442695
  %v1577 = vpow.pop %v1576
  %v1578 = vadd.f32 %v1577, 1.0
  %v1579 = vrcp.pop %v1578
  %v1580 = vmul.f32 1.0, %v1579
  %1581 = vmatprep.subr.bf16.mxu0 0
  %1582 = vmatpush1.bf16.msra.mxu0 %v660
  %1583 = vmatprep.subr.bf16.mxu0 0
  %1584 = vmatpush1.bf16.msra.mxu0 %v661
  %1585 = vmatprep.subr.bf16.mxu0 0
  %1586 = vmatpush1.bf16.msra.mxu0 0
  %1587 = vmatprep.subr.bf16.mxu0 0
  %1588 = vmatpush1.bf16.msra.mxu0 0
  %1589 = vmatprep.subr.bf16.mxu0 0
  %1590 = vmatpush1.bf16.msra.mxu0 0
  %1591 = vmatprep.subr.bf16.mxu0 0
  %1592 = vmatpush1.bf16.msra.mxu0 0
  %1593 = vmatprep.subr.bf16.mxu0 0
  %1594 = vmatpush1.bf16.msra.mxu0 0
  %1595 = vmatprep.subr.bf16.mxu0 0
  %1596 = vmatpush1.bf16.msra.mxu0 0
  %1597 = vmatprep.subr.bf16.mxu0 0
  %1598 = vmatpush1.bf16.msra.mxu0 0
  %1599 = vmatprep.subr.bf16.mxu0 0
  %1600 = vmatpush1.bf16.msra.mxu0 0
  %1601 = vmatprep.subr.bf16.mxu0 0
  %1602 = vmatpush1.bf16.msra.mxu0 0
  %1603 = vmatprep.subr.bf16.mxu0 0
  %1604 = vmatpush1.bf16.msra.mxu0 0
  %1605 = vmatprep.subr.bf16.mxu0 0
  %1606 = vmatpush1.bf16.msra.mxu0 0
  %1607 = vmatprep.subr.bf16.mxu0 0
  %1608 = vmatpush1.bf16.msra.mxu0 0
  %1609 = vmatprep.subr.bf16.mxu0 0
  %1610 = vmatpush1.bf16.msra.mxu0 0
  %1611 = vmatprep.subr.bf16.mxu0 0
  %1612 = vmatpush1.bf16.msra.mxu0 0
  %1613 = vmatprep.mubr.bf16.mxu0 0
  %1614 = vmatmul.mubr.bf16.gmra.mrb[0].mxu0 %v1485
  %v1615 = vpop.f32.mrb[0].mxu0
  %v1616 = vadd.f32 %v650, %v1615
  %v1617 = vpop.f32.mrb[0].mxu0
  %v1618 = vpop.f32.mrb[0].mxu0
  %v1619 = vpop.f32.mrb[0].mxu0
  %1620 = vdwg.mxu0
  %v1621 = vmul.f32 %v1573, %v1616
  %v1622 = vadd.f32 %v504, %v1621
  %v1623 = vtanh.pop %v1622
  %v1624 = vsub.f32 1.0, %v1580
  %v1625 = vmul.f32 %v1624, %v1623
  %v1626 = vmul.f32 %v1580, %v1472
  %v1627 = vadd.f32 %v1625, %v1626
  %1629 = vrot.lane.b32.xlu0 %v1627, 64
  %v1630 = vpop.permute.xlu0 %1629
  %1632 = vst.msk [vmem:[%s11 + $0x8] sm:$0xff] %vm1018, %v1630
  %1634 = vrot.lane.b32.xlu0 %v223, 64
  %v1635 = vpop.permute.xlu0 %1634
  %1637 = vst.msk [vmem:[%s10 + $0x8] sm:$0xff] %vm1018, %v1635
  %v1638 = vpack.c.bf16 %v1627, %v1627
  %v1640 = vsel %vm252, %v1638, 0
  %1642 = vmatprep.subr.bf16.mxu0 0
  %1643 = vmatpush1.bf16.msra.mxu0 %v533
  %1644 = vmatprep.subr.bf16.mxu0 0
  %1645 = vmatpush1.bf16.msra.mxu0 %v534
  %1646 = vmatprep.subr.bf16.mxu0 0
  %1647 = vmatpush1.bf16.msra.mxu0 0
  %1648 = vmatprep.subr.bf16.mxu0 0
  %1649 = vmatpush1.bf16.msra.mxu0 0
  %1650 = vmatprep.subr.bf16.mxu0 0
  %1651 = vmatpush1.bf16.msra.mxu0 0
  %1652 = vmatprep.subr.bf16.mxu0 0
  %1653 = vmatpush1.bf16.msra.mxu0 0
  %1654 = vmatprep.subr.bf16.mxu0 0
  %1655 = vmatpush1.bf16.msra.mxu0 0
  %1656 = vmatprep.subr.bf16.mxu0 0
  %1657 = vmatpush1.bf16.msra.mxu0 0
  %1658 = vmatprep.subr.bf16.mxu0 0
  %1659 = vmatpush1.bf16.msra.mxu0 0
  %1660 = vmatprep.subr.bf16.mxu0 0
  %1661 = vmatpush1.bf16.msra.mxu0 0
  %1662 = vmatprep.subr.bf16.mxu0 0
  %1663 = vmatpush1.bf16.msra.mxu0 0
  %1664 = vmatprep.subr.bf16.mxu0 0
  %1665 = vmatpush1.bf16.msra.mxu0 0
  %1666 = vmatprep.subr.bf16.mxu0 0
  %1667 = vmatpush1.bf16.msra.mxu0 0
  %1668 = vmatprep.subr.bf16.mxu0 0
  %1669 = vmatpush1.bf16.msra.mxu0 0
  %1670 = vmatprep.subr.bf16.mxu0 0
  %1671 = vmatpush1.bf16.msra.mxu0 0
  %1672 = vmatprep.subr.bf16.mxu0 0
  %1673 = vmatpush1.bf16.msra.mxu0 0
  %1674 = vmatprep.mubr.bf16.mxu0 0
  %1675 = vmatmul.mubr.bf16.gmra.mrb[0].mxu0 %v1640
  %v1676 = vpop.f32.mrb[0].mxu0
  %v1677 = vadd.f32 0.0, %v1676
  %v1678 = vpop.f32.mrb[0].mxu0
  %v1679 = vpop.f32.mrb[0].mxu0
  %v1680 = vpop.f32.mrb[0].mxu0
  %1681 = vdwg.mxu0
  %1682 = vmatprep.subr.bf16.mxu0 0
  %1683 = vmatpush1.bf16.msra.mxu0 %v588
  %1684 = vmatprep.subr.bf16.mxu0 0
  %1685 = vmatpush1.bf16.msra.mxu0 %v589
  %1686 = vmatprep.subr.bf16.mxu0 0
  %1687 = vmatpush1.bf16.msra.mxu0 0
  %1688 = vmatprep.subr.bf16.mxu0 0
  %1689 = vmatpush1.bf16.msra.mxu0 0
  %1690 = vmatprep.subr.bf16.mxu0 0
  %1691 = vmatpush1.bf16.msra.mxu0 0
  %1692 = vmatprep.subr.bf16.mxu0 0
  %1693 = vmatpush1.bf16.msra.mxu0 0
  %1694 = vmatprep.subr.bf16.mxu0 0
  %1695 = vmatpush1.bf16.msra.mxu0 0
  %1696 = vmatprep.subr.bf16.mxu0 0
  %1697 = vmatpush1.bf16.msra.mxu0 0
  %1698 = vmatprep.subr.bf16.mxu0 0
  %1699 = vmatpush1.bf16.msra.mxu0 0
  %1700 = vmatprep.subr.bf16.mxu0 0
  %1701 = vmatpush1.bf16.msra.mxu0 0
  %1702 = vmatprep.subr.bf16.mxu0 0
  %1703 = vmatpush1.bf16.msra.mxu0 0
  %1704 = vmatprep.subr.bf16.mxu0 0
  %1705 = vmatpush1.bf16.msra.mxu0 0
  %1706 = vmatprep.subr.bf16.mxu0 0
  %1707 = vmatpush1.bf16.msra.mxu0 0
  %1708 = vmatprep.subr.bf16.mxu0 0
  %1709 = vmatpush1.bf16.msra.mxu0 0
  %1710 = vmatprep.subr.bf16.mxu0 0
  %1711 = vmatpush1.bf16.msra.mxu0 0
  %1712 = vmatprep.subr.bf16.mxu0 0
  %1713 = vmatpush1.bf16.msra.mxu0 0
  %1714 = vmatprep.mubr.bf16.mxu0 0
  %1715 = vmatmul.mubr.bf16.gmra.mrb[0].mxu0 %v1640
  %v1716 = vpop.f32.mrb[0].mxu0
  %v1717 = vadd.f32 0.0, %v1716
  %v1718 = vpop.f32.mrb[0].mxu0
  %v1719 = vpop.f32.mrb[0].mxu0
  %v1720 = vpop.f32.mrb[0].mxu0
  %1721 = vdwg.mxu0
  %v1722 = vadd.f32 %v327, %v1677
  %v1723 = vxor.u32 %v1722, 2147483648
  %v1724 = vmul.f32 %v1723, 1.442695
  %v1725 = vpow.pop %v1724
  %v1726 = vadd.f32 %v1725, 1.0
  %v1727 = vrcp.pop %v1726
  %v1728 = vmul.f32 1.0, %v1727
  %v1729 = vadd.f32 %v417, %v1717
  %v1730 = vxor.u32 %v1729, 2147483648
  %v1731 = vmul.f32 %v1730, 1.442695
  %v1732 = vpow.pop %v1731
  %v1733 = vadd.f32 %v1732, 1.0
  %v1734 = vrcp.pop %v1733
  %v1735 = vmul.f32 1.0, %v1734
  %1736 = vmatprep.subr.bf16.mxu0 0
  %1737 = vmatpush1.bf16.msra.mxu0 %v660
  %1738 = vmatprep.subr.bf16.mxu0 0
  %1739 = vmatpush1.bf16.msra.mxu0 %v661
  %1740 = vmatprep.subr.bf16.mxu0 0
  %1741 = vmatpush1.bf16.msra.mxu0 0
  %1742 = vmatprep.subr.bf16.mxu0 0
  %1743 = vmatpush1.bf16.msra.mxu0 0
  %1744 = vmatprep.subr.bf16.mxu0 0
  %1745 = vmatpush1.bf16.msra.mxu0 0
  %1746 = vmatprep.subr.bf16.mxu0 0
  %1747 = vmatpush1.bf16.msra.mxu0 0
  %1748 = vmatprep.subr.bf16.mxu0 0
  %1749 = vmatpush1.bf16.msra.mxu0 0
  %1750 = vmatprep.subr.bf16.mxu0 0
  %1751 = vmatpush1.bf16.msra.mxu0 0
  %1752 = vmatprep.subr.bf16.mxu0 0
  %1753 = vmatpush1.bf16.msra.mxu0 0
  %1754 = vmatprep.subr.bf16.mxu0 0
  %1755 = vmatpush1.bf16.msra.mxu0 0
  %1756 = vmatprep.subr.bf16.mxu0 0
  %1757 = vmatpush1.bf16.msra.mxu0 0
  %1758 = vmatprep.subr.bf16.mxu0 0
  %1759 = vmatpush1.bf16.msra.mxu0 0
  %1760 = vmatprep.subr.bf16.mxu0 0
  %1761 = vmatpush1.bf16.msra.mxu0 0
  %1762 = vmatprep.subr.bf16.mxu0 0
  %1763 = vmatpush1.bf16.msra.mxu0 0
  %1764 = vmatprep.subr.bf16.mxu0 0
  %1765 = vmatpush1.bf16.msra.mxu0 0
  %1766 = vmatprep.subr.bf16.mxu0 0
  %1767 = vmatpush1.bf16.msra.mxu0 0
  %1768 = vmatprep.mubr.bf16.mxu0 0
  %1769 = vmatmul.mubr.bf16.gmra.mrb[0].mxu0 %v1640
  %v1770 = vpop.f32.mrb[0].mxu0
  %v1771 = vadd.f32 %v650, %v1770
  %v1772 = vpop.f32.mrb[0].mxu0
  %v1773 = vpop.f32.mrb[0].mxu0
  %v1774 = vpop.f32.mrb[0].mxu0
  %1775 = vdwg.mxu0
  %v1776 = vmul.f32 %v1728, %v1771
  %v1777 = vadd.f32 %v507, %v1776
  %v1778 = vtanh.pop %v1777
  %v1779 = vsub.f32 1.0, %v1735
  %v1780 = vmul.f32 %v1779, %v1778
  %v1781 = vmul.f32 %v1735, %v1627
  %v1782 = vadd.f32 %v1780, %v1781
  %1784 = vrot.lane.b32.xlu0 %v1782, 96
  %v1785 = vpop.permute.xlu0 %1784
  %1787 = vst.msk [vmem:[%s11 + $0x8] sm:$0xff] %vm1174, %v1785
  %1789 = vrot.lane.b32.xlu0 %v224, 96
  %v1790 = vpop.permute.xlu0 %1789
  %1792 = vst.msk [vmem:[%s10 + $0x8] sm:$0xff] %vm1174, %v1790
  %v1793 = vpack.c.bf16 %v1782, %v1782
  %v1794 = vld [vmem:[%s8] sm:$0xf]
  %v1795 = vld [vmem:[%s8 + $0x4] sm:$0xf]
  %v1796 = vld [vmem:[%s8 + $0x8] sm:$0xf]
  %v1797 = vld [vmem:[%s8 + $0xc] sm:$0xf]
  %v1798 = vld [vmem:[%s9] sm:$0x1]
  %v1800 = vlaneseq
  %v1801 = vshrl.u32 %v1800, 7
  %v1802 = vsub.s32 0, %v1801
  %v1803 = vrot.slane %v1798, %v1802
  %v1809 = vunpack.c.l.b16 %v1794
  %v1810 = vunpack.c.l.b16 %v1795
  %v1811 = vunpack.c.l.b16 %v1796
  %v1812 = vunpack.c.l.b16 %v1797
  %v1813 = vpack.c.b16 %v1810, %v1809
  %v1814 = vpack.c.b16 %v1812, %v1811
  %v1818 = vsel %vm252, %v1793, 0
  %1820 = vmatprep.subr.bf16.mxu0 0
  %1821 = vmatpush1.bf16.msra.mxu0 %v1813
  %1822 = vmatprep.subr.bf16.mxu0 0
  %1823 = vmatpush1.bf16.msra.mxu0 %v1814
  %1824 = vmatprep.subr.bf16.mxu0 0
  %1825 = vmatpush1.bf16.msra.mxu0 0
  %1826 = vmatprep.subr.bf16.mxu0 0
  %1827 = vmatpush1.bf16.msra.mxu0 0
  %1828 = vmatprep.subr.bf16.mxu0 0
  %1829 = vmatpush1.bf16.msra.mxu0 0
  %1830 = vmatprep.subr.bf16.mxu0 0
  %1831 = vmatpush1.bf16.msra.mxu0 0
  %1832 = vmatprep.subr.bf16.mxu0 0
  %1833 = vmatpush1.bf16.msra.mxu0 0
  %1834 = vmatprep.subr.bf16.mxu0 0
  %1835 = vmatpush1.bf16.msra.mxu0 0
  %1836 = vmatprep.subr.bf16.mxu0 0
  %1837 = vmatpush1.bf16.msra.mxu0 0
  %1838 = vmatprep.subr.bf16.mxu0 0
  %1839 = vmatpush1.bf16.msra.mxu0 0
  %1840 = vmatprep.subr.bf16.mxu0 0
  %1841 = vmatpush1.bf16.msra.mxu0 0
  %1842 = vmatprep.subr.bf16.mxu0 0
  %1843 = vmatpush1.bf16.msra.mxu0 0
  %1844 = vmatprep.subr.bf16.mxu0 0
  %1845 = vmatpush1.bf16.msra.mxu0 0
  %1846 = vmatprep.subr.bf16.mxu0 0
  %1847 = vmatpush1.bf16.msra.mxu0 0
  %1848 = vmatprep.subr.bf16.mxu0 0
  %1849 = vmatpush1.bf16.msra.mxu0 0
  %1850 = vmatprep.subr.bf16.mxu0 0
  %1851 = vmatpush1.bf16.msra.mxu0 0
  %1852 = vmatprep.mubr.bf16.mxu0 0
  %1853 = vmatmul.mubr.bf16.gmra.mrb[0].mxu0 %v1818
  %v1854 = vpop.f32.mrb[0].mxu0
  %v1855 = vadd.f32 %v1803, %v1854
  %v1856 = vpop.f32.mrb[0].mxu0
  %v1857 = vpop.f32.mrb[0].mxu0
  %v1858 = vpop.f32.mrb[0].mxu0
  %1859 = vdwg.mxu0
  %vm1860 = vcmask 31744
  %v1861 = vsel %vm1860, %v1855, -inf
  %1862 = vmax.xlane.f32.xlu0 %v1861
  %v1863 = vpop.xlane.xlu0 %1862
  %v1864 = vsub.f32 %v1855, %v1863
  %v1865 = vmul.f32 %v1864, 1.442695
  %v1866 = vpow.pop %v1865
  %v1867 = vsel %vm1860, %v1866, 0.0
  %1868 = vadd.xlane.f32.xlu0 %v1867
  %v1869 = vpop.xlane.xlu0 %1868
  %v1870 = vrcp.pop %v1869
  %v1871 = vmul.f32 %v1866, %v1870
  %1872 = vst.msk [vmem:[%s12] sm:$0xff] %vm1860, %v1871
  %1874 = vrot.lane.b32.xlu0 %v1855, 4
  %v1875 = vpop.permute.xlu0 %1874
  %vm1877 = vcmask 64544
  %1878 = vst.msk [vmem:[%s12] sm:$0xff] %vm1877, %v1875
  // Predicated region
  $region42: #{rnn_forward.1} parent=0 // pred_check
    _
  $region43: #{rnn_forward.1} parent=0 // pred_check_branch
    %1880 = sbr.rel (0) target = $region45
  $region44: #{rnn_forward.1} parent=0 // pred_region
    _
  $region45: #{rnn_forward.1} parent=0 // pred_fallthru
    _
  // Predicated region
  $region46: #{rnn_forward.1} parent=0 // pred_check
    _
  $region47: #{rnn_forward.1} parent=0 // pred_check_branch
    %1882 = sbr.rel (0) target = $region49
  $region48: #{rnn_forward.1} parent=0 // pred_region
    _
  $region49: #{rnn_forward.1} parent=0 // pred_fallthru
    _
  // Predicated region
  $region50: #{rnn_forward.1} parent=0 // pred_check
    _
  $region51: #{rnn_forward.1} parent=0 // pred_check_branch
    %1884 = sbr.rel (0) target = $region53
  $region52: #{rnn_forward.1} parent=0 // pred_region
    _
  $region53: #{rnn_forward.1} parent=0 // pred_fallthru
    _
  // Predicated region
  $region54: #{rnn_forward.1} parent=0 // pred_check
    _
  $region55: #{rnn_forward.1} parent=0 // pred_check_branch
    %1886 = sbr.rel (0) target = $region57
  $region56: #{rnn_forward.1} parent=0 // pred_region
    _
  $region57: #{rnn_forward.1} parent=0 // pred_fallthru
    _
  // Predicated region
  $region58: #{rnn_forward.1} parent=0 // pred_check
    _
  $region59: #{rnn_forward.1} parent=0 // pred_check_branch
    %1888 = sbr.rel (0) target = $region61
  $region60: #{rnn_forward.1} parent=0 // pred_region
    _
  $region61: #{rnn_forward.1} parent=0 // pred_fallthru
    _
  // Predicated region
  $region62: #{rnn_forward.1} parent=0 // pred_check
    _
  $region63: #{rnn_forward.1} parent=0 // pred_check_branch
    %1890 = sbr.rel (0) target = $region65
  $region64: #{rnn_forward.1} parent=0 // pred_region
    _
  $region65: #{rnn_forward.1} parent=0 // pred_fallthru
    _

</llo_original>
